<compile_context>
chip_gen: v7x
topology: tpu7x:2x2x1
jax: 0.10.0
libtpu: 0.0.40
codegen_flags: <defaults>
</compile_context>

<pallas_src>
import functools
import math

import jax
import jax.numpy as jnp
from jax.experimental import pallas as pl
from jax.experimental.pallas import tpu as pltpu


def _round_up(x, m):
    return (x + m - 1) // m * m


def residual_lstm_kernel(x_ref, wih1_ref, whh1_ref, b1_ref,
                         wih2_ref, whh2_ref, b2_ref,
                         out_ref,
                         h1_ref, c1_ref, h2_ref, c2_ref, gx_ref, d_ref,
                         *, hidden_dims, n_features, t_chunk, batch, unroll):
    H = hidden_dims
    F = n_features
    B = batch  # padded batch (multiple of 8)

    chunk = pl.program_id(0)

    # zero the recurrent state on the first chunk only (state persists across chunks)
    @pl.when(chunk == 0)
    def _():
        h1_ref[...] = jnp.zeros_like(h1_ref)
        c1_ref[...] = jnp.zeros_like(c1_ref)
        h2_ref[...] = jnp.zeros_like(h2_ref)
        c2_ref[...] = jnp.zeros_like(c2_ref)

    # Hoist lstm1's input projection for the whole chunk: one MXU-dense matmul of
    # shape (t_chunk*B, F) @ (F, 4H) instead of t_chunk tiny per-step matmuls.
    gx_ref[...] = (jnp.dot(x_ref[...], wih1_ref[...],
                           preferred_element_type=jnp.float32)
                   + b1_ref[...])

    # hoist weight loads and the bias broadcast out of the (unrolled) recurrence
    whh1 = whh1_ref[...]
    wih2 = wih2_ref[...]
    whh2 = whh2_ref[...]
    b2b = jnp.broadcast_to(b2_ref[...], (B, 4 * F))

    # recurrent state rides in the loop carry (vregs), not VMEM scratch
    carry0 = (h1_ref[...], c1_ref[...], h2_ref[...], c2_ref[...])

    def step(t, carry):
        h1, c1, h2, c2 = carry
        row = pl.multiple_of(t * B, B)        # 8-aligned sublane offset

        # ---- lstm1: input projection precomputed, only hidden matmul in-loop ----
        gates1 = gx_ref[pl.ds(row, B), :] + jnp.dot(
            h1, whh1, preferred_element_type=jnp.float32)
        # gate columns pre-permuted to (i, f, o, g): one sigmoid slab + one tanh slab
        sg1 = jax.nn.sigmoid(gates1[:, :3 * H])
        g1 = jnp.tanh(gates1[:, 3 * H:4 * H])
        i1 = sg1[:, 0 * H:1 * H]
        f1 = sg1[:, 1 * H:2 * H]
        o1 = sg1[:, 2 * H:3 * H]
        c1 = f1 * c1 + i1 * g1
        h1 = o1 * jnp.tanh(c1)

        # ---- lstm2: fed lstm1's cell state, state (h_t2, delta) ----
        gates2 = (jnp.dot(c1, wih2, preferred_element_type=jnp.float32)
                  + jnp.dot(h2, whh2, preferred_element_type=jnp.float32)
                  + b2b)
        sg2 = jax.nn.sigmoid(gates2[:, :3 * F])
        g2 = jnp.tanh(gates2[:, 3 * F:4 * F])
        i2 = sg2[:, 0 * F:1 * F]
        f2 = sg2[:, 1 * F:2 * F]
        o2 = sg2[:, 2 * F:3 * F]
        c2 = f2 * c2 + i2 * g2
        h2 = o2 * jnp.tanh(c2)

        # stash lstm2 cell state; the residual add is deferred to one chunk-wide add
        d_ref[pl.ds(row, B), :] = c2
        return (h1, c1, h2, c2)

    h1, c1, h2, c2 = jax.lax.fori_loop(0, t_chunk, step, carry0, unroll=unroll)

    # persist state across chunks (once per chunk, not once per step)
    h1_ref[...] = h1
    c1_ref[...] = c1
    h2_ref[...] = h2
    c2_ref[...] = c2

    # deferred residual: one vectorized add over the whole chunk, written into the
    # chunk's VMEM output block -> one HBM DMA per chunk.
    out_ref[...] = d_ref[...] + x_ref[...]


def _permute_gate_cols(w, out_dim):
    """Reorder gate columns from PyTorch (i, f, g, o) to (i, f, o, g)."""
    i = w[..., 0 * out_dim:1 * out_dim]
    f = w[..., 1 * out_dim:2 * out_dim]
    g = w[..., 2 * out_dim:3 * out_dim]
    o = w[..., 3 * out_dim:4 * out_dim]
    return jnp.concatenate([i, f, o, g], axis=-1)


def residual_lstm_forward(data, params, *, n_features, hidden_dims, t_chunk=None):
    """data: (B, T*n_features) float32.  Returns (B, T, F) (squeezed on axis 2 if F==1)."""
    wih1, whh1, b1, wih2, whh2, b2 = params
    B, L = data.shape
    F = n_features
    H = hidden_dims
    T = L // F

    # group-sigmoid gate ordering (i, f, o, g) expected by the kernel
    wih1 = _permute_gate_cols(wih1, H)
    whh1 = _permute_gate_cols(whh1, H)
    b1 = _permute_gate_cols(b1, H)
    wih2 = _permute_gate_cols(wih2, F)
    whh2 = _permute_gate_cols(whh2, F)
    b2 = _permute_gate_cols(b2, F)

    # pad batch to the sublane width (8); pad time to a multiple of the chunk
    B_pad = _round_up(max(B, 1), 8)
    if t_chunk is None:
        t_chunk = min(256, _round_up(T, 8))
    t_chunk = max(int(t_chunk), 1)
    T_pad = _round_up(T, t_chunk)
    num_chunks = T_pad // t_chunk
    if t_chunk % 8 == 0:
        unroll = 8
    elif t_chunk % 4 == 0:
        unroll = 4
    else:
        unroll = 1

    # (B, T*F) -> time-major rows (T_pad*B_pad, F): row (t*B_pad + b) holds x[b, t, :].
    # Time-major keeps every per-step slice contiguous and lets the chunk input matmul
    # be hoisted; the one-off layout pass is negligible vs the serial recurrence.
    x = data.reshape(B, T, F)
    x = jnp.pad(x, ((0, B_pad - B), (0, T_pad - T), (0, 0)))
    x_rows = x.transpose(1, 0, 2).reshape(T_pad * B_pad, F)

    kernel = functools.partial(residual_lstm_kernel,
                               hidden_dims=H, n_features=F,
                               t_chunk=t_chunk, batch=B_pad, unroll=unroll)

    rows_per_chunk = t_chunk * B_pad

    # explicit scoped-VMEM budget, accounting for lane padding of narrow (F-wide) blocks
    def lane_pad(n):
        return _round_up(n, 128)

    vmem_bytes = 4 * (
        2 * rows_per_chunk * lane_pad(F)          # x input block (double-buffered)
        + 2 * rows_per_chunk * lane_pad(F)        # output block (double-buffered)
        + rows_per_chunk * lane_pad(4 * H)        # gx scratch
        + rows_per_chunk * lane_pad(F)            # c2-chunk scratch
        + 2 * _round_up(F, 8) * lane_pad(4 * H)   # W_ih1
        + 2 * _round_up(H, 8) * lane_pad(4 * H)   # W_hh1
        + 2 * _round_up(H, 8) * lane_pad(4 * F)   # W_ih2
        + 2 * _round_up(F, 8) * lane_pad(4 * F)   # W_hh2
        + 4 * 8 * lane_pad(4 * H)                 # biases (generous)
        + 2 * 8 * lane_pad(H) + 2 * 8 * lane_pad(F)   # state scratch
    )
    vmem_limit = int(min(max(2 * vmem_bytes, 32 << 20), 64 << 20))

    out_rows = pl.pallas_call(
        kernel,
        out_shape=jax.ShapeDtypeStruct((T_pad * B_pad, F), jnp.float32),
        grid_spec=pltpu.PrefetchScalarGridSpec(
            num_scalar_prefetch=0,
            grid=(num_chunks,),
            in_specs=[
                pl.BlockSpec((rows_per_chunk, F), lambda c: (c, 0)),   # input chunk
                pl.BlockSpec((F, 4 * H), lambda c: (0, 0)),            # W_ih1^T (i,f,o,g)
                pl.BlockSpec((H, 4 * H), lambda c: (0, 0)),            # W_hh1^T
                pl.BlockSpec((1, 4 * H), lambda c: (0, 0)),            # b_ih1 + b_hh1
                pl.BlockSpec((H, 4 * F), lambda c: (0, 0)),            # W_ih2^T
                pl.BlockSpec((F, 4 * F), lambda c: (0, 0)),            # W_hh2^T
                pl.BlockSpec((1, 4 * F), lambda c: (0, 0)),            # b_ih2 + b_hh2
            ],
            out_specs=pl.BlockSpec((rows_per_chunk, F), lambda c: (c, 0)),
            scratch_shapes=[
                pltpu.VMEM((B_pad, H), jnp.float32),                    # h_t   (chunk carry)
                pltpu.VMEM((B_pad, H), jnp.float32),                    # c_t
                pltpu.VMEM((B_pad, F), jnp.float32),                    # h_t2
                pltpu.VMEM((B_pad, F), jnp.float32),                    # delta
                pltpu.VMEM((rows_per_chunk, 4 * H), jnp.float32),       # hoisted x@W_ih1+b
                pltpu.VMEM((rows_per_chunk, F), jnp.float32),           # per-chunk c2 stash
            ],
        ),
        compiler_params=pltpu.CompilerParams(
            dimension_semantics=("arbitrary",),   # recurrent carry -> sequential axis
            vmem_limit_bytes=vmem_limit),
    )(x_rows, wih1, whh1, b1, wih2, whh2, b2)

    out = out_rows.reshape(T_pad, B_pad, F)[:T, :B, :].transpose(1, 0, 2)  # (B, T, F)
    if F == 1:
        out = jnp.squeeze(out, axis=2)  # matches torch .squeeze(2)
    return out


def init_params(key, n_features, hidden_dims):
    """PyTorch LSTMCell init: U(-1/sqrt(hidden), 1/sqrt(hidden)) for all params.
    Returned in standard PyTorch gate order (i, f, g, o), transposed for x @ W."""
    F, H = n_features, hidden_dims
    ks = jax.random.split(key, 8)

    def u(k, shape, bound):
        return jax.random.uniform(k, shape, jnp.float32, -bound, bound)

    k1 = 1.0 / math.sqrt(H)
    w_ih1 = u(ks[0], (4 * H, F), k1)
    w_hh1 = u(ks[1], (4 * H, H), k1)
    b_ih1 = u(ks[2], (4 * H,), k1)
    b_hh1 = u(ks[3], (4 * H,), k1)

    k2 = 1.0 / math.sqrt(F)
    w_ih2 = u(ks[4], (4 * F, H), k2)
    w_hh2 = u(ks[5], (4 * F, F), k2)
    b_ih2 = u(ks[6], (4 * F,), k2)
    b_hh2 = u(ks[7], (4 * F,), k2)

    # transpose for x @ W layout; fold biases together, keep 2D for TPU
    params = (w_ih1.T, w_hh1.T, (b_ih1 + b_hh1)[None, :],
              w_ih2.T, w_hh2.T, (b_ih2 + b_hh2)[None, :])
    return params


def residual_lstm_reference(data, params, *, n_features, hidden_dims):
    """Pure-JAX reference (lax.scan) mirroring the PyTorch forward (standard gate order)."""
    wih1, whh1, b1, wih2, whh2, b2 = params
    B, L = data.shape
    F, H = n_features, hidden_dims
    T = L // F
    x_seq = data.reshape(B, T, F).transpose(1, 0, 2)

    def cell(x, h, c, w_ih, w_hh, b, out_dim):
        gates = x @ w_ih + h @ w_hh + b
        i = jax.nn.sigmoid(gates[:, 0 * out_dim:1 * out_dim])
        f = jax.nn.sigmoid(gates[:, 1 * out_dim:2 * out_dim])
        g = jnp.tanh(gates[:, 2 * out_dim:3 * out_dim])
        o = jax.nn.sigmoid(gates[:, 3 * out_dim:4 * out_dim])
        c_new = f * c + i * g
        return o * jnp.tanh(c_new), c_new

    def step(carry, x):
        h1, c1, h2, c2 = carry
        h1, c1 = cell(x, h1, c1, wih1, whh1, b1, H)
        h2, c2 = cell(c1, h2, c2, wih2, whh2, b2, F)
        return (h1, c1, h2, c2), c2 + x

    init = (jnp.zeros((B, H), jnp.float32), jnp.zeros((B, H), jnp.float32),
            jnp.zeros((B, F), jnp.float32), jnp.zeros((B, F), jnp.float32))
    _, ys = jax.lax.scan(step, init, x_seq)
    out = ys.transpose(1, 0, 2)
    if F == 1:
        out = jnp.squeeze(out, axis=2)
    return out


if __name__ == "__main__":
    B = 2
    n_features = 4
    hidden_dims = 32
    T = 8

    key = jax.random.PRNGKey(0)
    k_data, k_params = jax.random.split(key)

    # data: (batch, time_samples * n_features) — same flattened layout as the torch module
    data = jax.random.normal(k_data, (B, T * n_features), dtype=jnp.float32)
    params = init_params(k_params, n_features, hidden_dims)

    # t_chunk=4 -> two chunks, exercising the cross-chunk state carry path
    out = residual_lstm_forward(data, params,
                                n_features=n_features, hidden_dims=hidden_dims,
                                t_chunk=4)
    out = jax.block_until_ready(out)

    # also run with the default (single-chunk) path once
    out_default = residual_lstm_forward(data, params,
                                        n_features=n_features,
                                        hidden_dims=hidden_dims)
    out_default = jax.block_until_ready(out_default)

    ref = residual_lstm_reference(data, params,
                                  n_features=n_features, hidden_dims=hidden_dims)
    ref = jax.block_until_ready(ref)

    assert out.shape == (B, T, n_features), out.shape
    assert jnp.allclose(out, ref, atol=1e-5, rtol=1e-5), "mismatch vs reference (chunked)"
    assert jnp.allclose(out_default, ref, atol=1e-5, rtol=1e-5), "mismatch vs reference"

    # TODO(synk): `future > 0` autoregressive rollout not implemented (default future=0).
    print("KERNEL_OK")
</pallas_src>

<mosaic_0001>
module attributes {stable_mosaic.version = 11 : i64} {
  func.func @residual_lstm_kernel(%arg0: i32, %arg1: memref<32x4xf32, #tpu.memory_space<vmem>>, %arg2: memref<4x128xf32, #tpu.memory_space<vmem>>, %arg3: memref<32x128xf32, #tpu.memory_space<vmem>>, %arg4: memref<1x128xf32, #tpu.memory_space<vmem>>, %arg5: memref<32x16xf32, #tpu.memory_space<vmem>>, %arg6: memref<4x16xf32, #tpu.memory_space<vmem>>, %arg7: memref<1x16xf32, #tpu.memory_space<vmem>>, %arg8: memref<32x4xf32, #tpu.memory_space<vmem>>, %arg9: memref<8x32xf32, #tpu.memory_space<vmem>>, %arg10: memref<8x32xf32, #tpu.memory_space<vmem>>, %arg11: memref<8x4xf32, #tpu.memory_space<vmem>>, %arg12: memref<8x4xf32, #tpu.memory_space<vmem>>, %arg13: memref<32x128xf32, #tpu.memory_space<vmem>>, %arg14: memref<32x4xf32, #tpu.memory_space<vmem>>) attributes {dimension_semantics = [#tpu.dimension_semantics<arbitrary>], iteration_bounds = array<i64: 2>, scalar_prefetch = 0 : i64, scratch_operands = 6 : i64, tpu.core_type = #tpu.core_type<tc>, window_params = [{transform_indices = @transform_0, window_bounds = array<i64: 32, 4>}, {pipeline_mode = #tpu.pipeline_mode<synchronous>, transform_indices = @transform_1, window_bounds = array<i64: 4, 128>}, {pipeline_mode = #tpu.pipeline_mode<synchronous>, transform_indices = @transform_2, window_bounds = array<i64: 32, 128>}, {pipeline_mode = #tpu.pipeline_mode<synchronous>, transform_indices = @transform_3, window_bounds = array<i64: 1, 128>}, {pipeline_mode = #tpu.pipeline_mode<synchronous>, transform_indices = @transform_4, window_bounds = array<i64: 32, 16>}, {pipeline_mode = #tpu.pipeline_mode<synchronous>, transform_indices = @transform_5, window_bounds = array<i64: 4, 16>}, {pipeline_mode = #tpu.pipeline_mode<synchronous>, transform_indices = @transform_6, window_bounds = array<i64: 1, 16>}, {transform_indices = @transform_7, window_bounds = array<i64: 32, 4>}]} {
    %c0_i32 = arith.constant 0 : i32
    %0 = arith.cmpi eq, %arg0, %c0_i32 : i32
    %1 = arith.extui %0 : i1 to i32
    %c0_i32_0 = arith.constant 0 : i32
    %2 = arith.cmpi ne, %1, %c0_i32_0 : i32
    scf.if %2 {
      %cst_70 = arith.constant 0.000000e+00 : f32
      %204 = vector.broadcast %cst_70 : f32 to vector<8x32xf32>
      %c0_71 = arith.constant 0 : index
      %c0_72 = arith.constant 0 : index
      %205 = vector.load %arg9[%c0_71, %c0_72] : memref<8x32xf32, #tpu.memory_space<vmem>>, vector<8x32xf32>
      tpu.vector_store %arg9[%c0_71, %c0_72], %204 {strides = array<i32>} : memref<8x32xf32, #tpu.memory_space<vmem>>, vector<8x32xf32>,
      %cst_73 = arith.constant 0.000000e+00 : f32
      %206 = vector.broadcast %cst_73 : f32 to vector<8x32xf32>
      %c0_74 = arith.constant 0 : index
      %c0_75 = arith.constant 0 : index
      %207 = vector.load %arg10[%c0_74, %c0_75] : memref<8x32xf32, #tpu.memory_space<vmem>>, vector<8x32xf32>
      tpu.vector_store %arg10[%c0_74, %c0_75], %206 {strides = array<i32>} : memref<8x32xf32, #tpu.memory_space<vmem>>, vector<8x32xf32>,
      %cst_76 = arith.constant 0.000000e+00 : f32
      %208 = vector.broadcast %cst_76 : f32 to vector<8x4xf32>
      %c0_77 = arith.constant 0 : index
      %c0_78 = arith.constant 0 : index
      %209 = vector.load %arg11[%c0_77, %c0_78] : memref<8x4xf32, #tpu.memory_space<vmem>>, vector<8x4xf32>
      tpu.vector_store %arg11[%c0_77, %c0_78], %208 {strides = array<i32>} : memref<8x4xf32, #tpu.memory_space<vmem>>, vector<8x4xf32>,
      %cst_79 = arith.constant 0.000000e+00 : f32
      %210 = vector.broadcast %cst_79 : f32 to vector<8x4xf32>
      %c0_80 = arith.constant 0 : index
      %c0_81 = arith.constant 0 : index
      %211 = vector.load %arg12[%c0_80, %c0_81] : memref<8x4xf32, #tpu.memory_space<vmem>>, vector<8x4xf32>
      tpu.vector_store %arg12[%c0_80, %c0_81], %210 {strides = array<i32>} : memref<8x4xf32, #tpu.memory_space<vmem>>, vector<8x4xf32>,
    } else {
    }
    %c0 = arith.constant 0 : index
    %c0_1 = arith.constant 0 : index
    %3 = vector.load %arg1[%c0, %c0_1] : memref<32x4xf32, #tpu.memory_space<vmem>>, vector<32x4xf32>
    %c0_2 = arith.constant 0 : index
    %c0_3 = arith.constant 0 : index
    %4 = vector.load %arg2[%c0_2, %c0_3] : memref<4x128xf32, #tpu.memory_space<vmem>>, vector<4x128xf32>
    %cst = arith.constant dense<0.000000e+00> : vector<32x128xf32>
    %5 = tpu.matmul %3, %4, %cst {dimension_numbers = #tpu.dot_dimension_numbers<[1], [0], [0], [1], [0, 0, 1, 1], [], []>} : vector<32x4xf32>, vector<4x128xf32>, vector<32x128xf32> -> vector<32x128xf32>
    %c0_4 = arith.constant 0 : index
    %c0_5 = arith.constant 0 : index
    %6 = vector.load %arg4[%c0_4, %c0_5] : memref<1x128xf32, #tpu.memory_space<vmem>>, vector<1x128xf32>
    %7 = vector.broadcast %6 : vector<1x128xf32> to vector<32x128xf32>
    %8 = arith.addf %5, %7 : vector<32x128xf32>
    %c0_6 = arith.constant 0 : index
    %c0_7 = arith.constant 0 : index
    %9 = vector.load %arg13[%c0_6, %c0_7] : memref<32x128xf32, #tpu.memory_space<vmem>>, vector<32x128xf32>
    tpu.vector_store %arg13[%c0_6, %c0_7], %8 {strides = array<i32>} : memref<32x128xf32, #tpu.memory_space<vmem>>, vector<32x128xf32>,
    %c0_8 = arith.constant 0 : index
    %c0_9 = arith.constant 0 : index
    %10 = vector.load %arg3[%c0_8, %c0_9] : memref<32x128xf32, #tpu.memory_space<vmem>>, vector<32x128xf32>
    %c0_10 = arith.constant 0 : index
    %c0_11 = arith.constant 0 : index
    %11 = vector.load %arg5[%c0_10, %c0_11] : memref<32x16xf32, #tpu.memory_space<vmem>>, vector<32x16xf32>
    %c0_12 = arith.constant 0 : index
    %c0_13 = arith.constant 0 : index
    %12 = vector.load %arg6[%c0_12, %c0_13] : memref<4x16xf32, #tpu.memory_space<vmem>>, vector<4x16xf32>
    %c0_14 = arith.constant 0 : index
    %c0_15 = arith.constant 0 : index
    %13 = vector.load %arg7[%c0_14, %c0_15] : memref<1x16xf32, #tpu.memory_space<vmem>>, vector<1x16xf32>
    %14 = vector.shape_cast %13 : vector<1x16xf32> to vector<1x16xf32>
    %15 = vector.broadcast %14 : vector<1x16xf32> to vector<8x16xf32>
    %c0_16 = arith.constant 0 : index
    %c0_17 = arith.constant 0 : index
    %16 = vector.load %arg9[%c0_16, %c0_17] : memref<8x32xf32, #tpu.memory_space<vmem>>, vector<8x32xf32>
    %c0_18 = arith.constant 0 : index
    %c0_19 = arith.constant 0 : index
    %17 = vector.load %arg10[%c0_18, %c0_19] : memref<8x32xf32, #tpu.memory_space<vmem>>, vector<8x32xf32>
    %c0_20 = arith.constant 0 : index
    %c0_21 = arith.constant 0 : index
    %18 = vector.load %arg11[%c0_20, %c0_21] : memref<8x4xf32, #tpu.memory_space<vmem>>, vector<8x4xf32>
    %c0_22 = arith.constant 0 : index
    %c0_23 = arith.constant 0 : index
    %19 = vector.load %arg12[%c0_22, %c0_23] : memref<8x4xf32, #tpu.memory_space<vmem>>, vector<8x4xf32>
    %c0_i32_24 = arith.constant 0 : i32
    %c8_i32 = arith.constant 8 : i32
    %20 = arith.muli %c0_i32_24, %c8_i32 : i32
    %21 = tpu.assume_multiple %20, 8 : i32
    %22 = arith.index_cast %21 : i32 to index
    %c0_25 = arith.constant 0 : index
    %23 = vector.load %arg13[%22, %c0_25] : memref<32x128xf32, #tpu.memory_space<vmem>>, vector<8x128xf32>
    %cst_26 = arith.constant dense<0.000000e+00> : vector<8x128xf32>
    %24 = tpu.matmul %16, %10, %cst_26 {dimension_numbers = #tpu.dot_dimension_numbers<[1], [0], [0], [1], [0, 0, 1, 1], [], []>} : vector<8x32xf32>, vector<32x128xf32>, vector<8x128xf32> -> vector<8x128xf32>
    %25 = arith.addf %23, %24 : vector<8x128xf32>
    %26 = vector.extract_strided_slice %25 {offsets = [0, 0], sizes = [8, 96], strides = [1, 1]} : vector<8x128xf32> to vector<8x96xf32>
    %27 = arith.negf %26 : vector<8x96xf32>
    %28 = math.exp %27 : vector<8x96xf32>
    %cst_27 = arith.constant 1.000000e+00 : f32
    %29 = vector.broadcast %cst_27 : f32 to vector<8x96xf32>
    %30 = arith.addf %29, %28 : vector<8x96xf32>
    %31 = arith.divf %29, %30 : vector<8x96xf32>
    %32 = vector.extract_strided_slice %25 {offsets = [0, 96], sizes = [8, 32], strides = [1, 1]} : vector<8x128xf32> to vector<8x32xf32>
    %33 = math.tanh %32 : vector<8x32xf32>
    %34 = vector.extract_strided_slice %31 {offsets = [0, 0], sizes = [8, 32], strides = [1, 1]} : vector<8x96xf32> to vector<8x32xf32>
    %35 = vector.extract_strided_slice %31 {offsets = [0, 32], sizes = [8, 32], strides = [1, 1]} : vector<8x96xf32> to vector<8x32xf32>
    %36 = vector.extract_strided_slice %31 {offsets = [0, 64], sizes = [8, 32], strides = [1, 1]} : vector<8x96xf32> to vector<8x32xf32>
    %37 = arith.mulf %35, %17 : vector<8x32xf32>
    %38 = arith.mulf %34, %33 : vector<8x32xf32>
    %39 = arith.addf %37, %38 : vector<8x32xf32>
    %40 = math.tanh %39 : vector<8x32xf32>
    %41 = arith.mulf %36, %40 : vector<8x32xf32>
    %cst_28 = arith.constant dense<0.000000e+00> : vector<8x16xf32>
    %42 = tpu.matmul %39, %11, %cst_28 {dimension_numbers = #tpu.dot_dimension_numbers<[1], [0], [0], [1], [0, 0, 1, 1], [], []>} : vector<8x32xf32>, vector<32x16xf32>, vector<8x16xf32> -> vector<8x16xf32>
    %cst_29 = arith.constant dense<0.000000e+00> : vector<8x16xf32>
    %43 = tpu.matmul %18, %12, %cst_29 {dimension_numbers = #tpu.dot_dimension_numbers<[1], [0], [0], [1], [0, 0, 1, 1], [], []>} : vector<8x4xf32>, vector<4x16xf32>, vector<8x16xf32> -> vector<8x16xf32>
    %44 = arith.addf %42, %43 : vector<8x16xf32>
    %45 = arith.addf %44, %15 : vector<8x16xf32>
    %46 = vector.extract_strided_slice %45 {offsets = [0, 0], sizes = [8, 12], strides = [1, 1]} : vector<8x16xf32> to vector<8x12xf32>
    %47 = arith.negf %46 : vector<8x12xf32>
    %48 = math.exp %47 : vector<8x12xf32>
    %cst_30 = arith.constant 1.000000e+00 : f32
    %49 = vector.broadcast %cst_30 : f32 to vector<8x12xf32>
    %50 = arith.addf %49, %48 : vector<8x12xf32>
    %51 = arith.divf %49, %50 : vector<8x12xf32>
    %52 = vector.extract_strided_slice %45 {offsets = [0, 12], sizes = [8, 4], strides = [1, 1]} : vector<8x16xf32> to vector<8x4xf32>
    %53 = math.tanh %52 : vector<8x4xf32>
    %54 = vector.extract_strided_slice %51 {offsets = [0, 0], sizes = [8, 4], strides = [1, 1]} : vector<8x12xf32> to vector<8x4xf32>
    %55 = vector.extract_strided_slice %51 {offsets = [0, 4], sizes = [8, 4], strides = [1, 1]} : vector<8x12xf32> to vector<8x4xf32>
    %56 = vector.extract_strided_slice %51 {offsets = [0, 8], sizes = [8, 4], strides = [1, 1]} : vector<8x12xf32> to vector<8x4xf32>
    %57 = arith.mulf %55, %19 : vector<8x4xf32>
    %58 = arith.mulf %54, %53 : vector<8x4xf32>
    %59 = arith.addf %57, %58 : vector<8x4xf32>
    %60 = math.tanh %59 : vector<8x4xf32>
    %61 = arith.mulf %56, %60 : vector<8x4xf32>
    %62 = arith.index_cast %21 : i32 to index
    %c0_31 = arith.constant 0 : index
    %63 = vector.load %arg14[%62, %c0_31] : memref<32x4xf32, #tpu.memory_space<vmem>>, vector<8x4xf32>
    tpu.vector_store %arg14[%62, %c0_31], %59 {strides = array<i32>} : memref<32x4xf32, #tpu.memory_space<vmem>>, vector<8x4xf32>,
    %c1_i32 = arith.constant 1 : i32
    %c8_i32_32 = arith.constant 8 : i32
    %64 = arith.muli %c1_i32, %c8_i32_32 : i32
    %65 = tpu.assume_multiple %64, 8 : i32
    %66 = arith.index_cast %65 : i32 to index
    %c0_33 = arith.constant 0 : index
    %67 = vector.load %arg13[%66, %c0_33] : memref<32x128xf32, #tpu.memory_space<vmem>>, vector<8x128xf32>
    %cst_34 = arith.constant dense<0.000000e+00> : vector<8x128xf32>
    %68 = tpu.matmul %41, %10, %cst_34 {dimension_numbers = #tpu.dot_dimension_numbers<[1], [0], [0], [1], [0, 0, 1, 1], [], []>} : vector<8x32xf32>, vector<32x128xf32>, vector<8x128xf32> -> vector<8x128xf32>
    %69 = arith.addf %67, %68 : vector<8x128xf32>
    %70 = vector.extract_strided_slice %69 {offsets = [0, 0], sizes = [8, 96], strides = [1, 1]} : vector<8x128xf32> to vector<8x96xf32>
    %71 = arith.negf %70 : vector<8x96xf32>
    %72 = math.exp %71 : vector<8x96xf32>
    %cst_35 = arith.constant 1.000000e+00 : f32
    %73 = vector.broadcast %cst_35 : f32 to vector<8x96xf32>
    %74 = arith.addf %73, %72 : vector<8x96xf32>
    %75 = arith.divf %73, %74 : vector<8x96xf32>
    %76 = vector.extract_strided_slice %69 {offsets = [0, 96], sizes = [8, 32], strides = [1, 1]} : vector<8x128xf32> to vector<8x32xf32>
    %77 = math.tanh %76 : vector<8x32xf32>
    %78 = vector.extract_strided_slice %75 {offsets = [0, 0], sizes = [8, 32], strides = [1, 1]} : vector<8x96xf32> to vector<8x32xf32>
    %79 = vector.extract_strided_slice %75 {offsets = [0, 32], sizes = [8, 32], strides = [1, 1]} : vector<8x96xf32> to vector<8x32xf32>
    %80 = vector.extract_strided_slice %75 {offsets = [0, 64], sizes = [8, 32], strides = [1, 1]} : vector<8x96xf32> to vector<8x32xf32>
    %81 = arith.mulf %79, %39 : vector<8x32xf32>
    %82 = arith.mulf %78, %77 : vector<8x32xf32>
    %83 = arith.addf %81, %82 : vector<8x32xf32>
    %84 = math.tanh %83 : vector<8x32xf32>
    %85 = arith.mulf %80, %84 : vector<8x32xf32>
    %cst_36 = arith.constant dense<0.000000e+00> : vector<8x16xf32>
    %86 = tpu.matmul %83, %11, %cst_36 {dimension_numbers = #tpu.dot_dimension_numbers<[1], [0], [0], [1], [0, 0, 1, 1], [], []>} : vector<8x32xf32>, vector<32x16xf32>, vector<8x16xf32> -> vector<8x16xf32>
    %cst_37 = arith.constant dense<0.000000e+00> : vector<8x16xf32>
    %87 = tpu.matmul %61, %12, %cst_37 {dimension_numbers = #tpu.dot_dimension_numbers<[1], [0], [0], [1], [0, 0, 1, 1], [], []>} : vector<8x4xf32>, vector<4x16xf32>, vector<8x16xf32> -> vector<8x16xf32>
    %88 = arith.addf %86, %87 : vector<8x16xf32>
    %89 = arith.addf %88, %15 : vector<8x16xf32>
    %90 = vector.extract_strided_slice %89 {offsets = [0, 0], sizes = [8, 12], strides = [1, 1]} : vector<8x16xf32> to vector<8x12xf32>
    %91 = arith.negf %90 : vector<8x12xf32>
    %92 = math.exp %91 : vector<8x12xf32>
    %cst_38 = arith.constant 1.000000e+00 : f32
    %93 = vector.broadcast %cst_38 : f32 to vector<8x12xf32>
    %94 = arith.addf %93, %92 : vector<8x12xf32>
    %95 = arith.divf %93, %94 : vector<8x12xf32>
    %96 = vector.extract_strided_slice %89 {offsets = [0, 12], sizes = [8, 4], strides = [1, 1]} : vector<8x16xf32> to vector<8x4xf32>
    %97 = math.tanh %96 : vector<8x4xf32>
    %98 = vector.extract_strided_slice %95 {offsets = [0, 0], sizes = [8, 4], strides = [1, 1]} : vector<8x12xf32> to vector<8x4xf32>
    %99 = vector.extract_strided_slice %95 {offsets = [0, 4], sizes = [8, 4], strides = [1, 1]} : vector<8x12xf32> to vector<8x4xf32>
    %100 = vector.extract_strided_slice %95 {offsets = [0, 8], sizes = [8, 4], strides = [1, 1]} : vector<8x12xf32> to vector<8x4xf32>
    %101 = arith.mulf %99, %59 : vector<8x4xf32>
    %102 = arith.mulf %98, %97 : vector<8x4xf32>
    %103 = arith.addf %101, %102 : vector<8x4xf32>
    %104 = math.tanh %103 : vector<8x4xf32>
    %105 = arith.mulf %100, %104 : vector<8x4xf32>
    %106 = arith.index_cast %65 : i32 to index
    %c0_39 = arith.constant 0 : index
    %107 = vector.load %arg14[%106, %c0_39] : memref<32x4xf32, #tpu.memory_space<vmem>>, vector<8x4xf32>
    tpu.vector_store %arg14[%106, %c0_39], %103 {strides = array<i32>} : memref<32x4xf32, #tpu.memory_space<vmem>>, vector<8x4xf32>,
    %c2_i32 = arith.constant 2 : i32
    %c8_i32_40 = arith.constant 8 : i32
    %108 = arith.muli %c2_i32, %c8_i32_40 : i32
    %109 = tpu.assume_multiple %108, 8 : i32
    %110 = arith.index_cast %109 : i32 to index
    %c0_41 = arith.constant 0 : index
    %111 = vector.load %arg13[%110, %c0_41] : memref<32x128xf32, #tpu.memory_space<vmem>>, vector<8x128xf32>
    %cst_42 = arith.constant dense<0.000000e+00> : vector<8x128xf32>
    %112 = tpu.matmul %85, %10, %cst_42 {dimension_numbers = #tpu.dot_dimension_numbers<[1], [0], [0], [1], [0, 0, 1, 1], [], []>} : vector<8x32xf32>, vector<32x128xf32>, vector<8x128xf32> -> vector<8x128xf32>
    %113 = arith.addf %111, %112 : vector<8x128xf32>
    %114 = vector.extract_strided_slice %113 {offsets = [0, 0], sizes = [8, 96], strides = [1, 1]} : vector<8x128xf32> to vector<8x96xf32>
    %115 = arith.negf %114 : vector<8x96xf32>
    %116 = math.exp %115 : vector<8x96xf32>
    %cst_43 = arith.constant 1.000000e+00 : f32
    %117 = vector.broadcast %cst_43 : f32 to vector<8x96xf32>
    %118 = arith.addf %117, %116 : vector<8x96xf32>
    %119 = arith.divf %117, %118 : vector<8x96xf32>
    %120 = vector.extract_strided_slice %113 {offsets = [0, 96], sizes = [8, 32], strides = [1, 1]} : vector<8x128xf32> to vector<8x32xf32>
    %121 = math.tanh %120 : vector<8x32xf32>
    %122 = vector.extract_strided_slice %119 {offsets = [0, 0], sizes = [8, 32], strides = [1, 1]} : vector<8x96xf32> to vector<8x32xf32>
    %123 = vector.extract_strided_slice %119 {offsets = [0, 32], sizes = [8, 32], strides = [1, 1]} : vector<8x96xf32> to vector<8x32xf32>
    %124 = vector.extract_strided_slice %119 {offsets = [0, 64], sizes = [8, 32], strides = [1, 1]} : vector<8x96xf32> to vector<8x32xf32>
    %125 = arith.mulf %123, %83 : vector<8x32xf32>
    %126 = arith.mulf %122, %121 : vector<8x32xf32>
    %127 = arith.addf %125, %126 : vector<8x32xf32>
    %128 = math.tanh %127 : vector<8x32xf32>
    %129 = arith.mulf %124, %128 : vector<8x32xf32>
    %cst_44 = arith.constant dense<0.000000e+00> : vector<8x16xf32>
    %130 = tpu.matmul %127, %11, %cst_44 {dimension_numbers = #tpu.dot_dimension_numbers<[1], [0], [0], [1], [0, 0, 1, 1], [], []>} : vector<8x32xf32>, vector<32x16xf32>, vector<8x16xf32> -> vector<8x16xf32>
    %cst_45 = arith.constant dense<0.000000e+00> : vector<8x16xf32>
    %131 = tpu.matmul %105, %12, %cst_45 {dimension_numbers = #tpu.dot_dimension_numbers<[1], [0], [0], [1], [0, 0, 1, 1], [], []>} : vector<8x4xf32>, vector<4x16xf32>, vector<8x16xf32> -> vector<8x16xf32>
    %132 = arith.addf %130, %131 : vector<8x16xf32>
    %133 = arith.addf %132, %15 : vector<8x16xf32>
    %134 = vector.extract_strided_slice %133 {offsets = [0, 0], sizes = [8, 12], strides = [1, 1]} : vector<8x16xf32> to vector<8x12xf32>
    %135 = arith.negf %134 : vector<8x12xf32>
    %136 = math.exp %135 : vector<8x12xf32>
    %cst_46 = arith.constant 1.000000e+00 : f32
    %137 = vector.broadcast %cst_46 : f32 to vector<8x12xf32>
    %138 = arith.addf %137, %136 : vector<8x12xf32>
    %139 = arith.divf %137, %138 : vector<8x12xf32>
    %140 = vector.extract_strided_slice %133 {offsets = [0, 12], sizes = [8, 4], strides = [1, 1]} : vector<8x16xf32> to vector<8x4xf32>
    %141 = math.tanh %140 : vector<8x4xf32>
    %142 = vector.extract_strided_slice %139 {offsets = [0, 0], sizes = [8, 4], strides = [1, 1]} : vector<8x12xf32> to vector<8x4xf32>
    %143 = vector.extract_strided_slice %139 {offsets = [0, 4], sizes = [8, 4], strides = [1, 1]} : vector<8x12xf32> to vector<8x4xf32>
    %144 = vector.extract_strided_slice %139 {offsets = [0, 8], sizes = [8, 4], strides = [1, 1]} : vector<8x12xf32> to vector<8x4xf32>
    %145 = arith.mulf %143, %103 : vector<8x4xf32>
    %146 = arith.mulf %142, %141 : vector<8x4xf32>
    %147 = arith.addf %145, %146 : vector<8x4xf32>
    %148 = math.tanh %147 : vector<8x4xf32>
    %149 = arith.mulf %144, %148 : vector<8x4xf32>
    %150 = arith.index_cast %109 : i32 to index
    %c0_47 = arith.constant 0 : index
    %151 = vector.load %arg14[%150, %c0_47] : memref<32x4xf32, #tpu.memory_space<vmem>>, vector<8x4xf32>
    tpu.vector_store %arg14[%150, %c0_47], %147 {strides = array<i32>} : memref<32x4xf32, #tpu.memory_space<vmem>>, vector<8x4xf32>,
    %c3_i32 = arith.constant 3 : i32
    %c8_i32_48 = arith.constant 8 : i32
    %152 = arith.muli %c3_i32, %c8_i32_48 : i32
    %153 = tpu.assume_multiple %152, 8 : i32
    %154 = arith.index_cast %153 : i32 to index
    %c0_49 = arith.constant 0 : index
    %155 = vector.load %arg13[%154, %c0_49] : memref<32x128xf32, #tpu.memory_space<vmem>>, vector<8x128xf32>
    %cst_50 = arith.constant dense<0.000000e+00> : vector<8x128xf32>
    %156 = tpu.matmul %129, %10, %cst_50 {dimension_numbers = #tpu.dot_dimension_numbers<[1], [0], [0], [1], [0, 0, 1, 1], [], []>} : vector<8x32xf32>, vector<32x128xf32>, vector<8x128xf32> -> vector<8x128xf32>
    %157 = arith.addf %155, %156 : vector<8x128xf32>
    %158 = vector.extract_strided_slice %157 {offsets = [0, 0], sizes = [8, 96], strides = [1, 1]} : vector<8x128xf32> to vector<8x96xf32>
    %159 = arith.negf %158 : vector<8x96xf32>
    %160 = math.exp %159 : vector<8x96xf32>
    %cst_51 = arith.constant 1.000000e+00 : f32
    %161 = vector.broadcast %cst_51 : f32 to vector<8x96xf32>
    %162 = arith.addf %161, %160 : vector<8x96xf32>
    %163 = arith.divf %161, %162 : vector<8x96xf32>
    %164 = vector.extract_strided_slice %157 {offsets = [0, 96], sizes = [8, 32], strides = [1, 1]} : vector<8x128xf32> to vector<8x32xf32>
    %165 = math.tanh %164 : vector<8x32xf32>
    %166 = vector.extract_strided_slice %163 {offsets = [0, 0], sizes = [8, 32], strides = [1, 1]} : vector<8x96xf32> to vector<8x32xf32>
    %167 = vector.extract_strided_slice %163 {offsets = [0, 32], sizes = [8, 32], strides = [1, 1]} : vector<8x96xf32> to vector<8x32xf32>
    %168 = vector.extract_strided_slice %163 {offsets = [0, 64], sizes = [8, 32], strides = [1, 1]} : vector<8x96xf32> to vector<8x32xf32>
    %169 = arith.mulf %167, %127 : vector<8x32xf32>
    %170 = arith.mulf %166, %165 : vector<8x32xf32>
    %171 = arith.addf %169, %170 : vector<8x32xf32>
    %172 = math.tanh %171 : vector<8x32xf32>
    %173 = arith.mulf %168, %172 : vector<8x32xf32>
    %cst_52 = arith.constant dense<0.000000e+00> : vector<8x16xf32>
    %174 = tpu.matmul %171, %11, %cst_52 {dimension_numbers = #tpu.dot_dimension_numbers<[1], [0], [0], [1], [0, 0, 1, 1], [], []>} : vector<8x32xf32>, vector<32x16xf32>, vector<8x16xf32> -> vector<8x16xf32>
    %cst_53 = arith.constant dense<0.000000e+00> : vector<8x16xf32>
    %175 = tpu.matmul %149, %12, %cst_53 {dimension_numbers = #tpu.dot_dimension_numbers<[1], [0], [0], [1], [0, 0, 1, 1], [], []>} : vector<8x4xf32>, vector<4x16xf32>, vector<8x16xf32> -> vector<8x16xf32>
    %176 = arith.addf %174, %175 : vector<8x16xf32>
    %177 = arith.addf %176, %15 : vector<8x16xf32>
    %178 = vector.extract_strided_slice %177 {offsets = [0, 0], sizes = [8, 12], strides = [1, 1]} : vector<8x16xf32> to vector<8x12xf32>
    %179 = arith.negf %178 : vector<8x12xf32>
    %180 = math.exp %179 : vector<8x12xf32>
    %cst_54 = arith.constant 1.000000e+00 : f32
    %181 = vector.broadcast %cst_54 : f32 to vector<8x12xf32>
    %182 = arith.addf %181, %180 : vector<8x12xf32>
    %183 = arith.divf %181, %182 : vector<8x12xf32>
    %184 = vector.extract_strided_slice %177 {offsets = [0, 12], sizes = [8, 4], strides = [1, 1]} : vector<8x16xf32> to vector<8x4xf32>
    %185 = math.tanh %184 : vector<8x4xf32>
    %186 = vector.extract_strided_slice %183 {offsets = [0, 0], sizes = [8, 4], strides = [1, 1]} : vector<8x12xf32> to vector<8x4xf32>
    %187 = vector.extract_strided_slice %183 {offsets = [0, 4], sizes = [8, 4], strides = [1, 1]} : vector<8x12xf32> to vector<8x4xf32>
    %188 = vector.extract_strided_slice %183 {offsets = [0, 8], sizes = [8, 4], strides = [1, 1]} : vector<8x12xf32> to vector<8x4xf32>
    %189 = arith.mulf %187, %147 : vector<8x4xf32>
    %190 = arith.mulf %186, %185 : vector<8x4xf32>
    %191 = arith.addf %189, %190 : vector<8x4xf32>
    %192 = math.tanh %191 : vector<8x4xf32>
    %193 = arith.mulf %188, %192 : vector<8x4xf32>
    %194 = arith.index_cast %153 : i32 to index
    %c0_55 = arith.constant 0 : index
    %195 = vector.load %arg14[%194, %c0_55] : memref<32x4xf32, #tpu.memory_space<vmem>>, vector<8x4xf32>
    tpu.vector_store %arg14[%194, %c0_55], %191 {strides = array<i32>} : memref<32x4xf32, #tpu.memory_space<vmem>>, vector<8x4xf32>,
    %c4_i32 = arith.constant 4 : i32
    %c0_56 = arith.constant 0 : index
    %c0_57 = arith.constant 0 : index
    %196 = vector.load %arg9[%c0_56, %c0_57] : memref<8x32xf32, #tpu.memory_space<vmem>>, vector<8x32xf32>
    tpu.vector_store %arg9[%c0_56, %c0_57], %173 {strides = array<i32>} : memref<8x32xf32, #tpu.memory_space<vmem>>, vector<8x32xf32>,
    %c0_58 = arith.constant 0 : index
    %c0_59 = arith.constant 0 : index
    %197 = vector.load %arg10[%c0_58, %c0_59] : memref<8x32xf32, #tpu.memory_space<vmem>>, vector<8x32xf32>
    tpu.vector_store %arg10[%c0_58, %c0_59], %171 {strides = array<i32>} : memref<8x32xf32, #tpu.memory_space<vmem>>, vector<8x32xf32>,
    %c0_60 = arith.constant 0 : index
    %c0_61 = arith.constant 0 : index
    %198 = vector.load %arg11[%c0_60, %c0_61] : memref<8x4xf32, #tpu.memory_space<vmem>>, vector<8x4xf32>
    tpu.vector_store %arg11[%c0_60, %c0_61], %193 {strides = array<i32>} : memref<8x4xf32, #tpu.memory_space<vmem>>, vector<8x4xf32>,
    %c0_62 = arith.constant 0 : index
    %c0_63 = arith.constant 0 : index
    %199 = vector.load %arg12[%c0_62, %c0_63] : memref<8x4xf32, #tpu.memory_space<vmem>>, vector<8x4xf32>
    tpu.vector_store %arg12[%c0_62, %c0_63], %191 {strides = array<i32>} : memref<8x4xf32, #tpu.memory_space<vmem>>, vector<8x4xf32>,
    %c0_64 = arith.constant 0 : index
    %c0_65 = arith.constant 0 : index
    %200 = vector.load %arg14[%c0_64, %c0_65] : memref<32x4xf32, #tpu.memory_space<vmem>>, vector<32x4xf32>
    %c0_66 = arith.constant 0 : index
    %c0_67 = arith.constant 0 : index
    %201 = vector.load %arg1[%c0_66, %c0_67] : memref<32x4xf32, #tpu.memory_space<vmem>>, vector<32x4xf32>
    %202 = arith.addf %200, %201 : vector<32x4xf32>
    %c0_68 = arith.constant 0 : index
    %c0_69 = arith.constant 0 : index
    %203 = vector.load %arg8[%c0_68, %c0_69] : memref<32x4xf32, #tpu.memory_space<vmem>>, vector<32x4xf32>
    tpu.vector_store %arg8[%c0_68, %c0_69], %202 {strides = array<i32>} : memref<32x4xf32, #tpu.memory_space<vmem>>, vector<32x4xf32>,
    return
  }
  func.func @transform_0(%arg0: i32) -> (i32, i32) {
    %c0_i32 = arith.constant 0 : i32
    %c0_i32_0 = arith.constant 0 : i32
    return %arg0, %c0_i32 : i32, i32
  }
  func.func @transform_1(%arg0: i32) -> (i32, i32) {
    %c0_i32 = arith.constant 0 : i32
    %c0_i32_0 = arith.constant 0 : i32
    %c0_i32_1 = arith.constant 0 : i32
    return %c0_i32, %c0_i32_0 : i32, i32
  }
  func.func @transform_2(%arg0: i32) -> (i32, i32) {
    %c0_i32 = arith.constant 0 : i32
    %c0_i32_0 = arith.constant 0 : i32
    %c0_i32_1 = arith.constant 0 : i32
    return %c0_i32, %c0_i32_0 : i32, i32
  }
  func.func @transform_3(%arg0: i32) -> (i32, i32) {
    %c0_i32 = arith.constant 0 : i32
    %c0_i32_0 = arith.constant 0 : i32
    %c0_i32_1 = arith.constant 0 : i32
    return %c0_i32, %c0_i32_0 : i32, i32
  }
  func.func @transform_4(%arg0: i32) -> (i32, i32) {
    %c0_i32 = arith.constant 0 : i32
    %c0_i32_0 = arith.constant 0 : i32
    %c0_i32_1 = arith.constant 0 : i32
    return %c0_i32, %c0_i32_0 : i32, i32
  }
  func.func @transform_5(%arg0: i32) -> (i32, i32) {
    %c0_i32 = arith.constant 0 : i32
    %c0_i32_0 = arith.constant 0 : i32
    %c0_i32_1 = arith.constant 0 : i32
    return %c0_i32, %c0_i32_0 : i32, i32
  }
  func.func @transform_6(%arg0: i32) -> (i32, i32) {
    %c0_i32 = arith.constant 0 : i32
    %c0_i32_0 = arith.constant 0 : i32
    %c0_i32_1 = arith.constant 0 : i32
    return %c0_i32, %c0_i32_0 : i32, i32
  }
  func.func @transform_7(%arg0: i32) -> (i32, i32) {
    %c0_i32 = arith.constant 0 : i32
    %c0_i32_0 = arith.constant 0 : i32
    return %arg0, %c0_i32 : i32, i32
  }
}

</mosaic_0001>

<llo_original>
// kernel: tpu_custom_call.1
$region0: #{tpu_custom_call.1}
  #allocation0 [shape = 'u32[]', space=smem, size = 0x4, offset = 0x4, fixed_abs, tag = 'smem constant byte address 0x4 - core index']
  #allocation1 [shape = 'u32[144,128]{1,0:T(1,128)}', space=vmem, size = 0x12000, scoped, tag = 'internal scratch']
  #allocation2 [shape = 'f32[8,32]{1,0:T(8,128)}', space=vmem, size = 0x1000, scoped, tag = 'scratch operand']
  #allocation3 [shape = 'f32[8,32]{1,0:T(8,128)}', space=vmem, size = 0x1000, scoped, tag = 'scratch operand']
  #allocation4 [shape = 'f32[8,4]{1,0:T(8,128)}', space=vmem, size = 0x1000, scoped, tag = 'scratch operand']
  #allocation5 [shape = 'f32[8,4]{1,0:T(8,128)}', space=vmem, size = 0x1000, scoped, tag = 'scratch operand']
  #allocation6 [shape = 'f32[32,128]{1,0:T(8,128)}', space=vmem, size = 0x4000, scoped, tag = 'scratch operand']
  #allocation7 [shape = 'f32[32,4]{1,0:T(8,128)}', space=vmem, size = 0x4000, scoped, tag = 'scratch operand']
  %s0 = inlined_call_operand.vmem [shape: f32[64,4], index: 0, kind: input, shape index: {}]
  %s1 = inlined_call_operand.vmem [shape: f32[4,128], index: 1, kind: input, shape index: {}]
  %s2 = inlined_call_operand.vmem [shape: f32[32,128], index: 2, kind: input, shape index: {}]
  %s3 = inlined_call_operand.vmem [shape: f32[1,128], index: 3, kind: input, shape index: {}]
  %s4 = inlined_call_operand.vmem [shape: f32[32,16], index: 4, kind: input, shape index: {}]
  %s5 = inlined_call_operand.vmem [shape: f32[4,16], index: 5, kind: input, shape index: {}]
  %s6 = inlined_call_operand.vmem [shape: f32[1,16], index: 6, kind: input, shape index: {}]
  %s7 = inlined_call_operand.vmem [shape: f32[64,4], index: 7, kind: output, shape index: {}]
  %s8 = sld [smem:[#allocation0]]
  $region65: #{tpu_custom_call.1} parent=0
    _
  %s10 = ssub.s32 1, %s8
  %s11 = scalar_select 0, %s10, %s8
  loop: start=0, step=1, limit=4
  $region2: #{tpu_custom_call.1} parent=0 // loop_pre_header
    _
  $region3: #{tpu_custom_call.1} parent=0 // loop_header
    %s13 = sphi 0, %s17
    %p14 = scmp.ge.s32.totalorder %s13, 4
    %s23 = sphi 0, %s25
    %s26 = sphi 0, %s23
    %s27 = sphi 0, %s26
    %s43 = sphi 0, %s27
    %s47 = sphi 0, %s47
    %s49 = sphi 0, %s47
    %s50 = sphi 0, %s49
    %s64 = sphi 0, %s50
    %s68 = sphi 0, %s68
    %s70 = sphi 0, %s68
    %s71 = sphi 0, %s70
    %s85 = sphi 0, %s71
    %s89 = sphi 0, %s89
    %s91 = sphi 0, %s89
    %s92 = sphi 0, %s91
    %s106 = sphi 0, %s92
    %s110 = sphi 0, %s110
    %s112 = sphi 0, %s110
    %s113 = sphi 0, %s112
    %s127 = sphi 0, %s113
    %s131 = sphi 0, %s131
    %s133 = sphi 0, %s131
    %s134 = sphi 0, %s133
    %s148 = sphi 0, %s134
    %s152 = sphi 0, %s152
    %s154 = sphi 0, %s152
    %s155 = sphi 0, %s154
    %s169 = sphi 0, %s155
    %s175 = sphi 0, %s177
    %s178 = sphi 0, %s175
    %s179 = sphi 0, %s178
    %s195 = sphi 0, %s179
  $region4: #{tpu_custom_call.1} parent=0 // loop_header_branch
    %16 = sbr.rel (%p14) target = $region8
  $region5: #{tpu_custom_call.1} parent=0 // loop_body
    %s18 = ssub.s32 %s13, 1
    %s19 = ssub.s32 %s13, 2
    %s20 = sadd.s32 %s13, 1
    %s21 = ssub.s32 %s13, %s20
    %p22 = scmp.eq.s32.totalorder %s21, 0
    %s24 = sadd.s32 %s23, 1
    %s25 = scalar_select %p22, %s23, %s24
    %p28 = pneg %p22
    %p29 = scmp.eq.s32.totalorder %s13, 1
    %p30 = por %p28, %p29
    %p31 = scmp.ne.s32.totalorder %s23, %s26
    %p32 = scmp.eq.s32.totalorder %s13, 0
    %p33 = por %p31, %p32
    %p34 = scmp.ne.s32.totalorder %s23, %s26
    %p35 = scmp.eq.s32.totalorder %s18, 1
    %p36 = por %p34, %p35
    %p37 = scmp.ne.s32.totalorder %s26, %s27
    %p38 = scmp.eq.s32.totalorder %s18, 0
    %p39 = por %p37, %p38
    %p40 = scmp.ne.s32.totalorder %s26, %s27
    %p41 = scmp.eq.s32.totalorder %s19, 1
    %p42 = por %p40, %p41
    %p44 = scmp.ne.s32.totalorder %s27, %s43
    %p45 = scmp.eq.s32.totalorder %s19, 0
    %p46 = por %p44, %p45
    %s48 = sadd.s32 %s47, 1
    %p51 = scmp.eq.s32.totalorder %s13, 1
    %p52 = scmp.ne.s32.totalorder %s47, %s49
    %p53 = scmp.eq.s32.totalorder %s13, 0
    %p54 = por %p52, %p53
    %p55 = scmp.ne.s32.totalorder %s47, %s49
    %p56 = scmp.eq.s32.totalorder %s18, 1
    %p57 = por %p55, %p56
    %p58 = scmp.ne.s32.totalorder %s49, %s50
    %p59 = scmp.eq.s32.totalorder %s18, 0
    %p60 = por %p58, %p59
    %p61 = scmp.ne.s32.totalorder %s49, %s50
    %p62 = scmp.eq.s32.totalorder %s19, 1
    %p63 = por %p61, %p62
    %p65 = scmp.ne.s32.totalorder %s50, %s64
    %p66 = scmp.eq.s32.totalorder %s19, 0
    %p67 = por %p65, %p66
    %s69 = sadd.s32 %s68, 1
    %p72 = scmp.eq.s32.totalorder %s13, 1
    %p73 = scmp.ne.s32.totalorder %s68, %s70
    %p74 = scmp.eq.s32.totalorder %s13, 0
    %p75 = por %p73, %p74
    %p76 = scmp.ne.s32.totalorder %s68, %s70
    %p77 = scmp.eq.s32.totalorder %s18, 1
    %p78 = por %p76, %p77
    %p79 = scmp.ne.s32.totalorder %s70, %s71
    %p80 = scmp.eq.s32.totalorder %s18, 0
    %p81 = por %p79, %p80
    %p82 = scmp.ne.s32.totalorder %s70, %s71
    %p83 = scmp.eq.s32.totalorder %s19, 1
    %p84 = por %p82, %p83
    %p86 = scmp.ne.s32.totalorder %s71, %s85
    %p87 = scmp.eq.s32.totalorder %s19, 0
    %p88 = por %p86, %p87
    %s90 = sadd.s32 %s89, 1
    %p93 = scmp.eq.s32.totalorder %s13, 1
    %p94 = scmp.ne.s32.totalorder %s89, %s91
    %p95 = scmp.eq.s32.totalorder %s13, 0
    %p96 = por %p94, %p95
    %p97 = scmp.ne.s32.totalorder %s89, %s91
    %p98 = scmp.eq.s32.totalorder %s18, 1
    %p99 = por %p97, %p98
    %p100 = scmp.ne.s32.totalorder %s91, %s92
    %p101 = scmp.eq.s32.totalorder %s18, 0
    %p102 = por %p100, %p101
    %p103 = scmp.ne.s32.totalorder %s91, %s92
    %p104 = scmp.eq.s32.totalorder %s19, 1
    %p105 = por %p103, %p104
    %p107 = scmp.ne.s32.totalorder %s92, %s106
    %p108 = scmp.eq.s32.totalorder %s19, 0
    %p109 = por %p107, %p108
    %s111 = sadd.s32 %s110, 1
    %p114 = scmp.eq.s32.totalorder %s13, 1
    %p115 = scmp.ne.s32.totalorder %s110, %s112
    %p116 = scmp.eq.s32.totalorder %s13, 0
    %p117 = por %p115, %p116
    %p118 = scmp.ne.s32.totalorder %s110, %s112
    %p119 = scmp.eq.s32.totalorder %s18, 1
    %p120 = por %p118, %p119
    %p121 = scmp.ne.s32.totalorder %s112, %s113
    %p122 = scmp.eq.s32.totalorder %s18, 0
    %p123 = por %p121, %p122
    %p124 = scmp.ne.s32.totalorder %s112, %s113
    %p125 = scmp.eq.s32.totalorder %s19, 1
    %p126 = por %p124, %p125
    %p128 = scmp.ne.s32.totalorder %s113, %s127
    %p129 = scmp.eq.s32.totalorder %s19, 0
    %p130 = por %p128, %p129
    %s132 = sadd.s32 %s131, 1
    %p135 = scmp.eq.s32.totalorder %s13, 1
    %p136 = scmp.ne.s32.totalorder %s131, %s133
    %p137 = scmp.eq.s32.totalorder %s13, 0
    %p138 = por %p136, %p137
    %p139 = scmp.ne.s32.totalorder %s131, %s133
    %p140 = scmp.eq.s32.totalorder %s18, 1
    %p141 = por %p139, %p140
    %p142 = scmp.ne.s32.totalorder %s133, %s134
    %p143 = scmp.eq.s32.totalorder %s18, 0
    %p144 = por %p142, %p143
    %p145 = scmp.ne.s32.totalorder %s133, %s134
    %p146 = scmp.eq.s32.totalorder %s19, 1
    %p147 = por %p145, %p146
    %p149 = scmp.ne.s32.totalorder %s134, %s148
    %p150 = scmp.eq.s32.totalorder %s19, 0
    %p151 = por %p149, %p150
    %s153 = sadd.s32 %s152, 1
    %p156 = scmp.eq.s32.totalorder %s13, 1
    %p157 = scmp.ne.s32.totalorder %s152, %s154
    %p158 = scmp.eq.s32.totalorder %s13, 0
    %p159 = por %p157, %p158
    %p160 = scmp.ne.s32.totalorder %s152, %s154
    %p161 = scmp.eq.s32.totalorder %s18, 1
    %p162 = por %p160, %p161
    %p163 = scmp.ne.s32.totalorder %s154, %s155
    %p164 = scmp.eq.s32.totalorder %s18, 0
    %p165 = por %p163, %p164
    %p166 = scmp.ne.s32.totalorder %s154, %s155
    %p167 = scmp.eq.s32.totalorder %s19, 1
    %p168 = por %p166, %p167
    %p170 = scmp.ne.s32.totalorder %s155, %s169
    %p171 = scmp.eq.s32.totalorder %s19, 0
    %p172 = por %p170, %p171
    %s173 = ssub.s32 %s13, %s20
    %p174 = scmp.eq.s32.totalorder %s173, 0
    %s176 = sadd.s32 %s175, 1
    %s177 = scalar_select %p174, %s175, %s176
    %p180 = pneg %p174
    %p181 = scmp.eq.s32.totalorder %s13, 1
    %p182 = por %p180, %p181
    %p183 = scmp.ne.s32.totalorder %s175, %s178
    %p184 = scmp.eq.s32.totalorder %s13, 0
    %p185 = por %p183, %p184
    %p186 = scmp.ne.s32.totalorder %s175, %s178
    %p187 = scmp.eq.s32.totalorder %s18, 1
    %p188 = por %p186, %p187
    %p189 = scmp.ne.s32.totalorder %s178, %s179
    %p190 = scmp.eq.s32.totalorder %s18, 0
    %p191 = por %p189, %p190
    %p192 = scmp.ne.s32.totalorder %s178, %s179
    %p193 = scmp.eq.s32.totalorder %s19, 1
    %p194 = por %p192, %p193
    %p196 = scmp.ne.s32.totalorder %s179, %s195
    %p197 = scmp.eq.s32.totalorder %s19, 0
    %p198 = por %p196, %p197
    %p199 = scmp.le.s32.totalorder 1, %s13
    %p200 = scmp.lt.s32.totalorder %s13, 3
    %p201 = pnand %p199, %p200
    %p202 = pneg %p201
    // Predicated region
    $region9: #{tpu_custom_call.1} parent=5 // pred_check
      _
    $region10: #{tpu_custom_call.1} parent=5 // pred_check_branch
      %204 = sbr.rel (%p201) target = $region12
    $region11: #{tpu_custom_call.1} parent=5 // pred_region
      %s205 = ssub.s32 %s13, 1
      // Predicated region
      $region13: #{tpu_custom_call.1} parent=11 // pred_check
        %p206 = pneg %p60
      $region14: #{tpu_custom_call.1} parent=11 // pred_check_branch
        %208 = sbr.rel (%p206) target = $region16
      $region15: #{tpu_custom_call.1} parent=11 // pred_region
        _
      $region16: #{tpu_custom_call.1} parent=11 // pred_fallthru
        _
      // Predicated region
      $region17: #{tpu_custom_call.1} parent=11 // pred_check
        %p209 = pneg %p81
      $region18: #{tpu_custom_call.1} parent=11 // pred_check_branch
        %211 = sbr.rel (%p209) target = $region20
      $region19: #{tpu_custom_call.1} parent=11 // pred_region
        _
      $region20: #{tpu_custom_call.1} parent=11 // pred_fallthru
        _
      // Predicated region
      $region21: #{tpu_custom_call.1} parent=11 // pred_check
        %p212 = pneg %p102
      $region22: #{tpu_custom_call.1} parent=11 // pred_check_branch
        %214 = sbr.rel (%p212) target = $region24
      $region23: #{tpu_custom_call.1} parent=11 // pred_region
        _
      $region24: #{tpu_custom_call.1} parent=11 // pred_fallthru
        _
      // Predicated region
      $region25: #{tpu_custom_call.1} parent=11 // pred_check
        %p215 = pneg %p123
      $region26: #{tpu_custom_call.1} parent=11 // pred_check_branch
        %217 = sbr.rel (%p215) target = $region28
      $region27: #{tpu_custom_call.1} parent=11 // pred_region
        _
      $region28: #{tpu_custom_call.1} parent=11 // pred_fallthru
        _
      // Predicated region
      $region29: #{tpu_custom_call.1} parent=11 // pred_check
        %p218 = pneg %p144
      $region30: #{tpu_custom_call.1} parent=11 // pred_check_branch
        %220 = sbr.rel (%p218) target = $region32
      $region31: #{tpu_custom_call.1} parent=11 // pred_region
        _
      $region32: #{tpu_custom_call.1} parent=11 // pred_fallthru
        _
      // Predicated region
      $region33: #{tpu_custom_call.1} parent=11 // pred_check
        %p221 = pneg %p165
      $region34: #{tpu_custom_call.1} parent=11 // pred_check_branch
        %223 = sbr.rel (%p221) target = $region36
      $region35: #{tpu_custom_call.1} parent=11 // pred_region
        _
      $region36: #{tpu_custom_call.1} parent=11 // pred_fallthru
        _
    $region12: #{tpu_custom_call.1} parent=5 // pred_fallthru
      _
    %p224 = scmp.lt.s32.totalorder %s13, 2
    // Predicated region
    $region37: #{tpu_custom_call.1} parent=5 // pred_check
      %p225 = pneg %p224
    $region38: #{tpu_custom_call.1} parent=5 // pred_check_branch
      %227 = sbr.rel (%p225) target = $region40
    $region39: #{tpu_custom_call.1} parent=5 // pred_region
      // Predicated region
      $region41: #{tpu_custom_call.1} parent=39 // pred_check
        %p228 = pneg %p33
      $region42: #{tpu_custom_call.1} parent=39 // pred_check_branch
        %230 = sbr.rel (%p228) target = $region44
      $region43: #{tpu_custom_call.1} parent=39 // pred_region
        %s231 = smul.u32 4, %s13
        %p232 = scmp.lt.s32.totalorder %s231, 7
        %s233 = scalar_select %p232, %s231, 7
        %s234 = smul.addr %s233, 8
        %s235 = scalar_lea.vmem %s0, %s234
        %s236 = smul.u32 4, %s13
      $region44: #{tpu_custom_call.1} parent=39 // pred_fallthru
        _
    $region40: #{tpu_custom_call.1} parent=5 // pred_fallthru
      _
    %p237 = scmp.le.s32.totalorder 1, %s13
    %p238 = scmp.lt.s32.totalorder %s13, 3
    %p239 = pnand %p237, %p238
    %p240 = pneg %p239
    // Predicated region
    $region45: #{tpu_custom_call.1} parent=5 // pred_check
      _
    $region46: #{tpu_custom_call.1} parent=5 // pred_check_branch
      %242 = sbr.rel (%p239) target = $region48
    $region47: #{tpu_custom_call.1} parent=5 // pred_region
      %s243 = ssub.s32 %s13, 1
      %s244 = smul.u32 4, %s18
      %p245 = scmp.lt.s32.totalorder %s244, 7
      %s246 = scalar_select %p245, %s244, 7
      %s247 = smul.addr %s246, 8
      %s248 = scalar_lea.vmem %s0, %s247
      %p249 = pneg %p39
      %p250 = pneg %p36
      %p251 = pneg %p60
      %p252 = pneg %p57
      %p253 = pneg %p81
      %p254 = pneg %p78
      %p255 = pneg %p102
      %p256 = pneg %p99
      %p257 = pneg %p123
      %p258 = pneg %p120
      %p259 = pneg %p144
      %p260 = pneg %p141
      %p261 = pneg %p165
      %p262 = pneg %p162
      %p263 = pneg %p191
      %p264 = pneg %p188
      %s265 = smul.u32 4, %s18
      %p266 = scmp.lt.s32.totalorder %s265, 7
      %s267 = scalar_select %p266, %s265, 7
      %s268 = smul.addr %s267, 8
      %s269 = scalar_lea.vmem %s7, %s268
      %s270 = smul.u32 4, %s18
      %p271 = scmp.lt.s32.totalorder %s270, 7
      %s272 = scalar_select %p271, %s270, 7
      %s273 = smul.addr %s272, 8
      %s274 = scalar_lea.vmem %s0, %s273
      %s275 = smul.u32 4, %s18
      %s276 = smul.u32 4, %s18
      %p277 = scmp.lt.s32.totalorder %s276, 7
      %s278 = scalar_select %p277, %s276, 7
      %s279 = smul.addr %s278, 8
      %s280 = scalar_lea.vmem %s7, %s279
      %s281 = smul.u32 4, %s18
      %p282 = scmp.eq.s32.totalorder %s18, 0
      // Predicated region
      $region49: #{tpu_custom_call.1} parent=47 // pred_check
        %p283 = pneg %p282
      $region50: #{tpu_custom_call.1} parent=47 // pred_check_branch
        %285 = sbr.rel (%p283) target = $region52
      $region51: #{tpu_custom_call.1} parent=47 // pred_region
        %vm286 = vcmask 261120
        %287 = vst.msk [vmem:[#allocation2] sm:$0xff] %vm286, 0.0
        %288 = vst.msk [vmem:[#allocation3] sm:$0xff] %vm286, 0.0
        %vm289 = vcmask 31744
        %290 = vst.msk [vmem:[#allocation4] sm:$0xff] %vm289, 0.0
        %291 = vst.msk [vmem:[#allocation5] sm:$0xff] %vm289, 0.0
      $region52: #{tpu_custom_call.1} parent=47 // pred_fallthru
        _
      %v292 = vld [vmem:[%s274] sm:$0xff]
      %v293 = vld [vmem:[%s274 + $0x8] sm:$0xff]
      %v294 = vld [vmem:[%s274 + $0x10] sm:$0xff]
      %v295 = vld [vmem:[%s274 + $0x18] sm:$0xff]
      %v296 = vld [vmem:[%s1] sm:$0xf]
      %v297 = vld [vmem:[%s3] sm:$0x1]
      %v299 = vlaneseq
      %v300 = vshrl.u32 %v299, 7
      %v301 = vsub.s32 0, %v300
      %v302 = vrot.slane %v297, %v301
      %vm304 = vcmask 31744
      %v306 = vsel %vm304, %v292, 0
      %v309 = vsel %vm304, %v293, 0
      %v312 = vsel %vm304, %v294, 0
      %v315 = vsel %vm304, %v295, 0
      %vm317 = vcmask 1043456
      %v319 = vsel %vm317, %v296, 0
      %321 = vmatprep.subr.mxu0 0.0
      %322 = vmatpush1.msra.mxu0 %v319
      %323 = vmatprep.subr.mxu0 0.0
      %324 = vmatpush1.msra.mxu0 0.0
      %325 = vmatprep.subr.mxu0 0.0
      %326 = vmatpush1.msra.mxu0 0.0
      %327 = vmatprep.subr.mxu0 0.0
      %328 = vmatpush1.msra.mxu0 0.0
      %329 = vmatprep.subr.mxu0 0.0
      %330 = vmatpush1.msra.mxu0 0.0
      %331 = vmatprep.subr.mxu0 0.0
      %332 = vmatpush1.msra.mxu0 0.0
      %333 = vmatprep.subr.mxu0 0.0
      %334 = vmatpush1.msra.mxu0 0.0
      %335 = vmatprep.subr.mxu0 0.0
      %336 = vmatpush1.msra.mxu0 0.0
      %337 = vmatprep.subr.mxu0 0.0
      %338 = vmatpush1.msra.mxu0 0.0
      %339 = vmatprep.subr.mxu0 0.0
      %340 = vmatpush1.msra.mxu0 0.0
      %341 = vmatprep.subr.mxu0 0.0
      %342 = vmatpush1.msra.mxu0 0.0
      %343 = vmatprep.subr.mxu0 0.0
      %344 = vmatpush1.msra.mxu0 0.0
      %345 = vmatprep.subr.mxu0 0.0
      %346 = vmatpush1.msra.mxu0 0.0
      %347 = vmatprep.subr.mxu0 0.0
      %348 = vmatpush1.msra.mxu0 0.0
      %349 = vmatprep.subr.mxu0 0.0
      %350 = vmatpush1.msra.mxu0 0.0
      %351 = vmatprep.subr.mxu0 0.0
      %352 = vmatpush1.msra.mxu0 0.0
      %353 = vmatprep.subr.mxu0 0.0
      %354 = vmatpush1.msra.mxu0 0.0
      %355 = vmatprep.subr.mxu0 0.0
      %356 = vmatpush1.msra.mxu0 0.0
      %357 = vmatprep.subr.mxu0 0.0
      %358 = vmatpush1.msra.mxu0 0.0
      %359 = vmatprep.subr.mxu0 0.0
      %360 = vmatpush1.msra.mxu0 0.0
      %361 = vmatprep.subr.mxu0 0.0
      %362 = vmatpush1.msra.mxu0 0.0
      %363 = vmatprep.subr.mxu0 0.0
      %364 = vmatpush1.msra.mxu0 0.0
      %365 = vmatprep.subr.mxu0 0.0
      %366 = vmatpush1.msra.mxu0 0.0
      %367 = vmatprep.subr.mxu0 0.0
      %368 = vmatpush1.msra.mxu0 0.0
      %369 = vmatprep.subr.mxu0 0.0
      %370 = vmatpush1.msra.mxu0 0.0
      %371 = vmatprep.subr.mxu0 0.0
      %372 = vmatpush1.msra.mxu0 0.0
      %373 = vmatprep.subr.mxu0 0.0
      %374 = vmatpush1.msra.mxu0 0.0
      %375 = vmatprep.subr.mxu0 0.0
      %376 = vmatpush1.msra.mxu0 0.0
      %377 = vmatprep.subr.mxu0 0.0
      %378 = vmatpush1.msra.mxu0 0.0
      %379 = vmatprep.subr.mxu0 0.0
      %380 = vmatpush1.msra.mxu0 0.0
      %381 = vmatprep.subr.mxu0 0.0
      %382 = vmatpush1.msra.mxu0 0.0
      %383 = vmatprep.subr.mxu0 0.0
      %384 = vmatpush1.msra.mxu0 0.0
      %385 = vmatprep.mubr.f32.mxu0 0.0
      %386 = vmatmul.mubr.f32.gmra.mrb[0].mxu0 %v306
      %v387 = vpop.f32.mrb[0].mxu0
      %v388 = vadd.f32 %v302, %v387
      %v389 = vpop.f32.mrb[0].mxu0
      %390 = vmatprep.mubr.f32.mxu0 0.0
      %391 = vmatmul.mubr.f32.gmra.mrb[0].mxu0 %v309
      %v392 = vpop.f32.mrb[0].mxu0
      %v393 = vadd.f32 %v302, %v392
      %v394 = vpop.f32.mrb[0].mxu0
      %395 = vmatprep.mubr.f32.mxu0 0.0
      %396 = vmatmul.mubr.f32.gmra.mrb[0].mxu0 %v312
      %v397 = vpop.f32.mrb[0].mxu0
      %v398 = vadd.f32 %v302, %v397
      %v399 = vpop.f32.mrb[0].mxu0
      %400 = vmatprep.mubr.f32.mxu0 0.0
      %401 = vmatmul.mubr.f32.gmra.mrb[0].mxu0 %v315
      %v402 = vpop.f32.mrb[0].mxu0
      %v403 = vadd.f32 %v302, %v402
      %v404 = vpop.f32.mrb[0].mxu0
      %405 = vdwg.mxu0
      %406 = vst [vmem:[#allocation6] sm:$0xff] %v388
      %407 = vst [vmem:[#allocation6 + $0x8] sm:$0xff] %v393
      %408 = vst [vmem:[#allocation6 + $0x10] sm:$0xff] %v398
      %409 = vst [vmem:[#allocation6 + $0x18] sm:$0xff] %v403
      %v410 = vld [vmem:[%s2] sm:$0xff]
      %v411 = vld [vmem:[%s2 + $0x8] sm:$0xff]
      %v412 = vld [vmem:[%s2 + $0x10] sm:$0xff]
      %v413 = vld [vmem:[%s2 + $0x18] sm:$0xff]
      %v414 = vld [vmem:[%s4] sm:$0xff]
      %v415 = vld [vmem:[%s4 + $0x8] sm:$0xff]
      %v416 = vld [vmem:[%s4 + $0x10] sm:$0xff]
      %v417 = vld [vmem:[%s4 + $0x18] sm:$0xff]
      %v418 = vld [vmem:[%s5] sm:$0xf]
      %v419 = vld [vmem:[%s6] sm:$0x1]
      %v421 = vlaneseq
      %v422 = vshrl.u32 %v421, 7
      %v423 = vsub.s32 0, %v422
      %v424 = vrot.slane %v419, %v423
      %v426 = vld [vmem:[#allocation2] sm:$0xff]
      %v427 = vld [vmem:[#allocation3] sm:$0xff]
      %v428 = vld [vmem:[#allocation4] sm:$0xff]
      %v429 = vld [vmem:[#allocation5] sm:$0xff]
      %v430 = vld [vmem:[#allocation6] sm:$0xff]
      %vm431 = vcmask 261120
      %v433 = vsel %vm431, %v426, 0
      %435 = vmatprep.subr.mxu0 0.0
      %436 = vmatpush1.msra.mxu0 %v410
      %437 = vmatprep.subr.mxu0 0.0
      %438 = vmatpush1.msra.mxu0 %v411
      %439 = vmatprep.subr.mxu0 0.0
      %440 = vmatpush1.msra.mxu0 %v412
      %441 = vmatprep.subr.mxu0 0.0
      %442 = vmatpush1.msra.mxu0 %v413
      %443 = vmatprep.subr.mxu0 0.0
      %444 = vmatpush1.msra.mxu0 0.0
      %445 = vmatprep.subr.mxu0 0.0
      %446 = vmatpush1.msra.mxu0 0.0
      %447 = vmatprep.subr.mxu0 0.0
      %448 = vmatpush1.msra.mxu0 0.0
      %449 = vmatprep.subr.mxu0 0.0
      %450 = vmatpush1.msra.mxu0 0.0
      %451 = vmatprep.subr.mxu0 0.0
      %452 = vmatpush1.msra.mxu0 0.0
      %453 = vmatprep.subr.mxu0 0.0
      %454 = vmatpush1.msra.mxu0 0.0
      %455 = vmatprep.subr.mxu0 0.0
      %456 = vmatpush1.msra.mxu0 0.0
      %457 = vmatprep.subr.mxu0 0.0
      %458 = vmatpush1.msra.mxu0 0.0
      %459 = vmatprep.subr.mxu0 0.0
      %460 = vmatpush1.msra.mxu0 0.0
      %461 = vmatprep.subr.mxu0 0.0
      %462 = vmatpush1.msra.mxu0 0.0
      %463 = vmatprep.subr.mxu0 0.0
      %464 = vmatpush1.msra.mxu0 0.0
      %465 = vmatprep.subr.mxu0 0.0
      %466 = vmatpush1.msra.mxu0 0.0
      %467 = vmatprep.subr.mxu0 0.0
      %468 = vmatpush1.msra.mxu0 0.0
      %469 = vmatprep.subr.mxu0 0.0
      %470 = vmatpush1.msra.mxu0 0.0
      %471 = vmatprep.subr.mxu0 0.0
      %472 = vmatpush1.msra.mxu0 0.0
      %473 = vmatprep.subr.mxu0 0.0
      %474 = vmatpush1.msra.mxu0 0.0
      %475 = vmatprep.subr.mxu0 0.0
      %476 = vmatpush1.msra.mxu0 0.0
      %477 = vmatprep.subr.mxu0 0.0
      %478 = vmatpush1.msra.mxu0 0.0
      %479 = vmatprep.subr.mxu0 0.0
      %480 = vmatpush1.msra.mxu0 0.0
      %481 = vmatprep.subr.mxu0 0.0
      %482 = vmatpush1.msra.mxu0 0.0
      %483 = vmatprep.subr.mxu0 0.0
      %484 = vmatpush1.msra.mxu0 0.0
      %485 = vmatprep.subr.mxu0 0.0
      %486 = vmatpush1.msra.mxu0 0.0
      %487 = vmatprep.subr.mxu0 0.0
      %488 = vmatpush1.msra.mxu0 0.0
      %489 = vmatprep.subr.mxu0 0.0
      %490 = vmatpush1.msra.mxu0 0.0
      %491 = vmatprep.subr.mxu0 0.0
      %492 = vmatpush1.msra.mxu0 0.0
      %493 = vmatprep.subr.mxu0 0.0
      %494 = vmatpush1.msra.mxu0 0.0
      %495 = vmatprep.subr.mxu0 0.0
      %496 = vmatpush1.msra.mxu0 0.0
      %497 = vmatprep.subr.mxu0 0.0
      %498 = vmatpush1.msra.mxu0 0.0
      %499 = vmatprep.mubr.f32.mxu0 0.0
      %500 = vmatmul.mubr.f32.gmra.mrb[0].mxu0 %v433
      %v501 = vpop.f32.mrb[0].mxu0
      %v502 = vadd.f32 0.0, %v501
      %v503 = vpop.f32.mrb[0].mxu0
      %504 = vdwg.mxu0
      %v505 = vadd.f32 %v430, %v502
      %v506 = vxor.u32 %v505, 2147483648
      %v507 = vmul.f32 %v506, 1.442695
      %v508 = vpow.pop %v507
      %v509 = vadd.f32 %v508, 1.0
      %v510 = vrcp.pop %v509
      %v511 = vmul.f32 1.0, %v510
      %v512 = vtanh.pop %v505
      %514 = vrot.lane.b32.xlu0 %v427, 32
      %v515 = vpop.permute.xlu0 %514
      %v517 = vmul.f32 %v511, %v515
      %519 = vrot.lane.b32.xlu0 %v512, 32
      %v520 = vpop.permute.xlu0 %519
      %v522 = vmul.f32 %v511, %v520
      %524 = vrot.lane.b32.xlu0 %v522, 32
      %v525 = vpop.permute.xlu0 %524
      %v527 = vadd.f32 %v517, %v525
      %v528 = vtanh.pop %v527
      %530 = vrot.lane.b32.xlu0 %v528, 32
      %v531 = vpop.permute.xlu0 %530
      %v533 = vmul.f32 %v511, %v531
      %v535 = vsel %vm304, %v428, 0
      %v538 = vsel %vm317, %v418, 0
      %540 = vmatprep.subr.mxu0 0.0
      %541 = vmatpush1.msra.mxu0 %v538
      %542 = vmatprep.subr.mxu0 0.0
      %543 = vmatpush1.msra.mxu0 0.0
      %544 = vmatprep.subr.mxu0 0.0
      %545 = vmatpush1.msra.mxu0 0.0
      %546 = vmatprep.subr.mxu0 0.0
      %547 = vmatpush1.msra.mxu0 0.0
      %548 = vmatprep.subr.mxu0 0.0
      %549 = vmatpush1.msra.mxu0 0.0
      %550 = vmatprep.subr.mxu0 0.0
      %551 = vmatpush1.msra.mxu0 0.0
      %552 = vmatprep.subr.mxu0 0.0
      %553 = vmatpush1.msra.mxu0 0.0
      %554 = vmatprep.subr.mxu0 0.0
      %555 = vmatpush1.msra.mxu0 0.0
      %556 = vmatprep.subr.mxu0 0.0
      %557 = vmatpush1.msra.mxu0 0.0
      %558 = vmatprep.subr.mxu0 0.0
      %559 = vmatpush1.msra.mxu0 0.0
      %560 = vmatprep.subr.mxu0 0.0
      %561 = vmatpush1.msra.mxu0 0.0
      %562 = vmatprep.subr.mxu0 0.0
      %563 = vmatpush1.msra.mxu0 0.0
      %564 = vmatprep.subr.mxu0 0.0
      %565 = vmatpush1.msra.mxu0 0.0
      %566 = vmatprep.subr.mxu0 0.0
      %567 = vmatpush1.msra.mxu0 0.0
      %568 = vmatprep.subr.mxu0 0.0
      %569 = vmatpush1.msra.mxu0 0.0
      %570 = vmatprep.subr.mxu0 0.0
      %571 = vmatpush1.msra.mxu0 0.0
      %572 = vmatprep.subr.mxu0 0.0
      %573 = vmatpush1.msra.mxu0 0.0
      %574 = vmatprep.subr.mxu0 0.0
      %575 = vmatpush1.msra.mxu0 0.0
      %576 = vmatprep.subr.mxu0 0.0
      %577 = vmatpush1.msra.mxu0 0.0
      %578 = vmatprep.subr.mxu0 0.0
      %579 = vmatpush1.msra.mxu0 0.0
      %580 = vmatprep.subr.mxu0 0.0
      %581 = vmatpush1.msra.mxu0 0.0
      %582 = vmatprep.subr.mxu0 0.0
      %583 = vmatpush1.msra.mxu0 0.0
      %584 = vmatprep.subr.mxu0 0.0
      %585 = vmatpush1.msra.mxu0 0.0
      %586 = vmatprep.subr.mxu0 0.0
      %587 = vmatpush1.msra.mxu0 0.0
      %588 = vmatprep.subr.mxu0 0.0
      %589 = vmatpush1.msra.mxu0 0.0
      %590 = vmatprep.subr.mxu0 0.0
      %591 = vmatpush1.msra.mxu0 0.0
      %592 = vmatprep.subr.mxu0 0.0
      %593 = vmatpush1.msra.mxu0 0.0
      %594 = vmatprep.subr.mxu0 0.0
      %595 = vmatpush1.msra.mxu0 0.0
      %596 = vmatprep.subr.mxu0 0.0
      %597 = vmatpush1.msra.mxu0 0.0
      %598 = vmatprep.subr.mxu0 0.0
      %599 = vmatpush1.msra.mxu0 0.0
      %600 = vmatprep.subr.mxu0 0.0
      %601 = vmatpush1.msra.mxu0 0.0
      %602 = vmatprep.subr.mxu0 0.0
      %603 = vmatpush1.msra.mxu0 0.0
      %604 = vmatprep.mubr.f32.mxu0 0.0
      %605 = vmatmul.mubr.f32.gmra.mrb[0].mxu0 %v535
      %v606 = vpop.f32.mrb[0].mxu0
      %v607 = vadd.f32 0.0, %v606
      %v608 = vpop.f32.mrb[0].mxu0
      %609 = vdwg.mxu0
      %611 = vrot.lane.b32.xlu0 %v527, 96
      %v612 = vpop.permute.xlu0 %611
      %v613 = vsel %vm431, %v612, 0
      %615 = vmatprep.subr.mxu0 0.0
      %616 = vmatpush1.msra.mxu0 %v414
      %617 = vmatprep.subr.mxu0 0.0
      %618 = vmatpush1.msra.mxu0 %v415
      %619 = vmatprep.subr.mxu0 0.0
      %620 = vmatpush1.msra.mxu0 %v416
      %621 = vmatprep.subr.mxu0 0.0
      %622 = vmatpush1.msra.mxu0 %v417
      %623 = vmatprep.subr.mxu0 0.0
      %624 = vmatpush1.msra.mxu0 0.0
      %625 = vmatprep.subr.mxu0 0.0
      %626 = vmatpush1.msra.mxu0 0.0
      %627 = vmatprep.subr.mxu0 0.0
      %628 = vmatpush1.msra.mxu0 0.0
      %629 = vmatprep.subr.mxu0 0.0
      %630 = vmatpush1.msra.mxu0 0.0
      %631 = vmatprep.subr.mxu0 0.0
      %632 = vmatpush1.msra.mxu0 0.0
      %633 = vmatprep.subr.mxu0 0.0
      %634 = vmatpush1.msra.mxu0 0.0
      %635 = vmatprep.subr.mxu0 0.0
      %636 = vmatpush1.msra.mxu0 0.0
      %637 = vmatprep.subr.mxu0 0.0
      %638 = vmatpush1.msra.mxu0 0.0
      %639 = vmatprep.subr.mxu0 0.0
      %640 = vmatpush1.msra.mxu0 0.0
      %641 = vmatprep.subr.mxu0 0.0
      %642 = vmatpush1.msra.mxu0 0.0
      %643 = vmatprep.subr.mxu0 0.0
      %644 = vmatpush1.msra.mxu0 0.0
      %645 = vmatprep.subr.mxu0 0.0
      %646 = vmatpush1.msra.mxu0 0.0
      %647 = vmatprep.subr.mxu0 0.0
      %648 = vmatpush1.msra.mxu0 0.0
      %649 = vmatprep.subr.mxu0 0.0
      %650 = vmatpush1.msra.mxu0 0.0
      %651 = vmatprep.subr.mxu0 0.0
      %652 = vmatpush1.msra.mxu0 0.0
      %653 = vmatprep.subr.mxu0 0.0
      %654 = vmatpush1.msra.mxu0 0.0
      %655 = vmatprep.subr.mxu0 0.0
      %656 = vmatpush1.msra.mxu0 0.0
      %657 = vmatprep.subr.mxu0 0.0
      %658 = vmatpush1.msra.mxu0 0.0
      %659 = vmatprep.subr.mxu0 0.0
      %660 = vmatpush1.msra.mxu0 0.0
      %661 = vmatprep.subr.mxu0 0.0
      %662 = vmatpush1.msra.mxu0 0.0
      %663 = vmatprep.subr.mxu0 0.0
      %664 = vmatpush1.msra.mxu0 0.0
      %665 = vmatprep.subr.mxu0 0.0
      %666 = vmatpush1.msra.mxu0 0.0
      %667 = vmatprep.subr.mxu0 0.0
      %668 = vmatpush1.msra.mxu0 0.0
      %669 = vmatprep.subr.mxu0 0.0
      %670 = vmatpush1.msra.mxu0 0.0
      %671 = vmatprep.subr.mxu0 0.0
      %672 = vmatpush1.msra.mxu0 0.0
      %673 = vmatprep.subr.mxu0 0.0
      %674 = vmatpush1.msra.mxu0 0.0
      %675 = vmatprep.subr.mxu0 0.0
      %676 = vmatpush1.msra.mxu0 0.0
      %677 = vmatprep.subr.mxu0 0.0
      %678 = vmatpush1.msra.mxu0 0.0
      %679 = vmatprep.mubr.f32.mxu0 0.0
      %680 = vmatmul.mubr.f32.gmra.mrb[0].mxu0 %v613
      %v681 = vpop.f32.mrb[0].mxu0
      %v682 = vadd.f32 %v607, %v681
      %v683 = vpop.f32.mrb[0].mxu0
      %684 = vdwg.mxu0
      %v685 = vadd.f32 %v682, %v424
      %v686 = vxor.u32 %v685, 2147483648
      %v687 = vmul.f32 %v686, 1.442695
      %v688 = vpow.pop %v687
      %v689 = vadd.f32 %v688, 1.0
      %v690 = vrcp.pop %v689
      %v691 = vmul.f32 1.0, %v690
      %v692 = vtanh.pop %v685
      %694 = vrot.lane.b32.xlu0 %v429, 4
      %v695 = vpop.permute.xlu0 %694
      %v697 = vmul.f32 %v691, %v695
      %699 = vrot.lane.b32.xlu0 %v692, 116
      %v700 = vpop.permute.xlu0 %699
      %v702 = vmul.f32 %v691, %v700
      %704 = vrot.lane.b32.xlu0 %v702, 4
      %v705 = vpop.permute.xlu0 %704
      %v707 = vadd.f32 %v697, %v705
      %v708 = vtanh.pop %v707
      %710 = vrot.lane.b32.xlu0 %v708, 4
      %v711 = vpop.permute.xlu0 %710
      %v713 = vmul.f32 %v691, %v711
      %715 = vrot.lane.b32.xlu0 %v707, 124
      %v716 = vpop.permute.xlu0 %715
      %718 = vst.msk [vmem:[#allocation7] sm:$0xff] %vm304, %v716
      %s719 = scalar_lea.vmem [#allocation6], 8
      %v720 = vld [vmem:[%s719] sm:$0xff]
      %722 = vrot.lane.b32.xlu0 %v533, 64
      %v723 = vpop.permute.xlu0 %722
      %v724 = vsel %vm431, %v723, 0
      %726 = vmatprep.subr.mxu0 0.0
      %727 = vmatpush1.msra.mxu0 %v410
      %728 = vmatprep.subr.mxu0 0.0
      %729 = vmatpush1.msra.mxu0 %v411
      %730 = vmatprep.subr.mxu0 0.0
      %731 = vmatpush1.msra.mxu0 %v412
      %732 = vmatprep.subr.mxu0 0.0
      %733 = vmatpush1.msra.mxu0 %v413
      %734 = vmatprep.subr.mxu0 0.0
      %735 = vmatpush1.msra.mxu0 0.0
      %736 = vmatprep.subr.mxu0 0.0
      %737 = vmatpush1.msra.mxu0 0.0
      %738 = vmatprep.subr.mxu0 0.0
      %739 = vmatpush1.msra.mxu0 0.0
      %740 = vmatprep.subr.mxu0 0.0
      %741 = vmatpush1.msra.mxu0 0.0
      %742 = vmatprep.subr.mxu0 0.0
      %743 = vmatpush1.msra.mxu0 0.0
      %744 = vmatprep.subr.mxu0 0.0
      %745 = vmatpush1.msra.mxu0 0.0
      %746 = vmatprep.subr.mxu0 0.0
      %747 = vmatpush1.msra.mxu0 0.0
      %748 = vmatprep.subr.mxu0 0.0
      %749 = vmatpush1.msra.mxu0 0.0
      %750 = vmatprep.subr.mxu0 0.0
      %751 = vmatpush1.msra.mxu0 0.0
      %752 = vmatprep.subr.mxu0 0.0
      %753 = vmatpush1.msra.mxu0 0.0
      %754 = vmatprep.subr.mxu0 0.0
      %755 = vmatpush1.msra.mxu0 0.0
      %756 = vmatprep.subr.mxu0 0.0
      %757 = vmatpush1.msra.mxu0 0.0
      %758 = vmatprep.subr.mxu0 0.0
      %759 = vmatpush1.msra.mxu0 0.0
      %760 = vmatprep.subr.mxu0 0.0
      %761 = vmatpush1.msra.mxu0 0.0
      %762 = vmatprep.subr.mxu0 0.0
      %763 = vmatpush1.msra.mxu0 0.0
      %764 = vmatprep.subr.mxu0 0.0
      %765 = vmatpush1.msra.mxu0 0.0
      %766 = vmatprep.subr.mxu0 0.0
      %767 = vmatpush1.msra.mxu0 0.0
      %768 = vmatprep.subr.mxu0 0.0
      %769 = vmatpush1.msra.mxu0 0.0
      %770 = vmatprep.subr.mxu0 0.0
      %771 = vmatpush1.msra.mxu0 0.0
      %772 = vmatprep.subr.mxu0 0.0
      %773 = vmatpush1.msra.mxu0 0.0
      %774 = vmatprep.subr.mxu0 0.0
      %775 = vmatpush1.msra.mxu0 0.0
      %776 = vmatprep.subr.mxu0 0.0
      %777 = vmatpush1.msra.mxu0 0.0
      %778 = vmatprep.subr.mxu0 0.0
      %779 = vmatpush1.msra.mxu0 0.0
      %780 = vmatprep.subr.mxu0 0.0
      %781 = vmatpush1.msra.mxu0 0.0
      %782 = vmatprep.subr.mxu0 0.0
      %783 = vmatpush1.msra.mxu0 0.0
      %784 = vmatprep.subr.mxu0 0.0
      %785 = vmatpush1.msra.mxu0 0.0
      %786 = vmatprep.subr.mxu0 0.0
      %787 = vmatpush1.msra.mxu0 0.0
      %788 = vmatprep.subr.mxu0 0.0
      %789 = vmatpush1.msra.mxu0 0.0
      %790 = vmatprep.mubr.f32.mxu0 0.0
      %791 = vmatmul.mubr.f32.gmra.mrb[0].mxu0 %v724
      %v792 = vpop.f32.mrb[0].mxu0
      %v793 = vadd.f32 0.0, %v792
      %v794 = vpop.f32.mrb[0].mxu0
      %795 = vdwg.mxu0
      %v796 = vadd.f32 %v720, %v793
      %v797 = vxor.u32 %v796, 2147483648
      %v798 = vmul.f32 %v797, 1.442695
      %v799 = vpow.pop %v798
      %v800 = vadd.f32 %v799, 1.0
      %v801 = vrcp.pop %v800
      %v802 = vmul.f32 1.0, %v801
      %v803 = vtanh.pop %v796
      %v804 = vmul.f32 %v802, %v527
      %806 = vrot.lane.b32.xlu0 %v803, 32
      %v807 = vpop.permute.xlu0 %806
      %v809 = vmul.f32 %v802, %v807
      %811 = vrot.lane.b32.xlu0 %v809, 32
      %v812 = vpop.permute.xlu0 %811
      %v814 = vadd.f32 %v804, %v812
      %v815 = vtanh.pop %v814
      %817 = vrot.lane.b32.xlu0 %v815, 32
      %v818 = vpop.permute.xlu0 %817
      %v820 = vmul.f32 %v802, %v818
      %822 = vrot.lane.b32.xlu0 %v713, 120
      %v823 = vpop.permute.xlu0 %822
      %v824 = vsel %vm304, %v823, 0
      %826 = vmatprep.subr.mxu0 0.0
      %827 = vmatpush1.msra.mxu0 %v538
      %828 = vmatprep.subr.mxu0 0.0
      %829 = vmatpush1.msra.mxu0 0.0
      %830 = vmatprep.subr.mxu0 0.0
      %831 = vmatpush1.msra.mxu0 0.0
      %832 = vmatprep.subr.mxu0 0.0
      %833 = vmatpush1.msra.mxu0 0.0
      %834 = vmatprep.subr.mxu0 0.0
      %835 = vmatpush1.msra.mxu0 0.0
      %836 = vmatprep.subr.mxu0 0.0
      %837 = vmatpush1.msra.mxu0 0.0
      %838 = vmatprep.subr.mxu0 0.0
      %839 = vmatpush1.msra.mxu0 0.0
      %840 = vmatprep.subr.mxu0 0.0
      %841 = vmatpush1.msra.mxu0 0.0
      %842 = vmatprep.subr.mxu0 0.0
      %843 = vmatpush1.msra.mxu0 0.0
      %844 = vmatprep.subr.mxu0 0.0
      %845 = vmatpush1.msra.mxu0 0.0
      %846 = vmatprep.subr.mxu0 0.0
      %847 = vmatpush1.msra.mxu0 0.0
      %848 = vmatprep.subr.mxu0 0.0
      %849 = vmatpush1.msra.mxu0 0.0
      %850 = vmatprep.subr.mxu0 0.0
      %851 = vmatpush1.msra.mxu0 0.0
      %852 = vmatprep.subr.mxu0 0.0
      %853 = vmatpush1.msra.mxu0 0.0
      %854 = vmatprep.subr.mxu0 0.0
      %855 = vmatpush1.msra.mxu0 0.0
      %856 = vmatprep.subr.mxu0 0.0
      %857 = vmatpush1.msra.mxu0 0.0
      %858 = vmatprep.subr.mxu0 0.0
      %859 = vmatpush1.msra.mxu0 0.0
      %860 = vmatprep.subr.mxu0 0.0
      %861 = vmatpush1.msra.mxu0 0.0
      %862 = vmatprep.subr.mxu0 0.0
      %863 = vmatpush1.msra.mxu0 0.0
      %864 = vmatprep.subr.mxu0 0.0
      %865 = vmatpush1.msra.mxu0 0.0
      %866 = vmatprep.subr.mxu0 0.0
      %867 = vmatpush1.msra.mxu0 0.0
      %868 = vmatprep.subr.mxu0 0.0
      %869 = vmatpush1.msra.mxu0 0.0
      %870 = vmatprep.subr.mxu0 0.0
      %871 = vmatpush1.msra.mxu0 0.0
      %872 = vmatprep.subr.mxu0 0.0
      %873 = vmatpush1.msra.mxu0 0.0
      %874 = vmatprep.subr.mxu0 0.0
      %875 = vmatpush1.msra.mxu0 0.0
      %876 = vmatprep.subr.mxu0 0.0
      %877 = vmatpush1.msra.mxu0 0.0
      %878 = vmatprep.subr.mxu0 0.0
      %879 = vmatpush1.msra.mxu0 0.0
      %880 = vmatprep.subr.mxu0 0.0
      %881 = vmatpush1.msra.mxu0 0.0
      %882 = vmatprep.subr.mxu0 0.0
      %883 = vmatpush1.msra.mxu0 0.0
      %884 = vmatprep.subr.mxu0 0.0
      %885 = vmatpush1.msra.mxu0 0.0
      %886 = vmatprep.subr.mxu0 0.0
      %887 = vmatpush1.msra.mxu0 0.0
      %888 = vmatprep.subr.mxu0 0.0
      %889 = vmatpush1.msra.mxu0 0.0
      %890 = vmatprep.mubr.f32.mxu0 0.0
      %891 = vmatmul.mubr.f32.gmra.mrb[0].mxu0 %v824
      %v892 = vpop.f32.mrb[0].mxu0
      %v893 = vadd.f32 0.0, %v892
      %v894 = vpop.f32.mrb[0].mxu0
      %895 = vdwg.mxu0
      %897 = vrot.lane.b32.xlu0 %v814, 96
      %v898 = vpop.permute.xlu0 %897
      %v899 = vsel %vm431, %v898, 0
      %901 = vmatprep.subr.mxu0 0.0
      %902 = vmatpush1.msra.mxu0 %v414
      %903 = vmatprep.subr.mxu0 0.0
      %904 = vmatpush1.msra.mxu0 %v415
      %905 = vmatprep.subr.mxu0 0.0
      %906 = vmatpush1.msra.mxu0 %v416
      %907 = vmatprep.subr.mxu0 0.0
      %908 = vmatpush1.msra.mxu0 %v417
      %909 = vmatprep.subr.mxu0 0.0
      %910 = vmatpush1.msra.mxu0 0.0
      %911 = vmatprep.subr.mxu0 0.0
      %912 = vmatpush1.msra.mxu0 0.0
      %913 = vmatprep.subr.mxu0 0.0
      %914 = vmatpush1.msra.mxu0 0.0
      %915 = vmatprep.subr.mxu0 0.0
      %916 = vmatpush1.msra.mxu0 0.0
      %917 = vmatprep.subr.mxu0 0.0
      %918 = vmatpush1.msra.mxu0 0.0
      %919 = vmatprep.subr.mxu0 0.0
      %920 = vmatpush1.msra.mxu0 0.0
      %921 = vmatprep.subr.mxu0 0.0
      %922 = vmatpush1.msra.mxu0 0.0
      %923 = vmatprep.subr.mxu0 0.0
      %924 = vmatpush1.msra.mxu0 0.0
      %925 = vmatprep.subr.mxu0 0.0
      %926 = vmatpush1.msra.mxu0 0.0
      %927 = vmatprep.subr.mxu0 0.0
      %928 = vmatpush1.msra.mxu0 0.0
      %929 = vmatprep.subr.mxu0 0.0
      %930 = vmatpush1.msra.mxu0 0.0
      %931 = vmatprep.subr.mxu0 0.0
      %932 = vmatpush1.msra.mxu0 0.0
      %933 = vmatprep.subr.mxu0 0.0
      %934 = vmatpush1.msra.mxu0 0.0
      %935 = vmatprep.subr.mxu0 0.0
      %936 = vmatpush1.msra.mxu0 0.0
      %937 = vmatprep.subr.mxu0 0.0
      %938 = vmatpush1.msra.mxu0 0.0
      %939 = vmatprep.subr.mxu0 0.0
      %940 = vmatpush1.msra.mxu0 0.0
      %941 = vmatprep.subr.mxu0 0.0
      %942 = vmatpush1.msra.mxu0 0.0
      %943 = vmatprep.subr.mxu0 0.0
      %944 = vmatpush1.msra.mxu0 0.0
      %945 = vmatprep.subr.mxu0 0.0
      %946 = vmatpush1.msra.mxu0 0.0
      %947 = vmatprep.subr.mxu0 0.0
      %948 = vmatpush1.msra.mxu0 0.0
      %949 = vmatprep.subr.mxu0 0.0
      %950 = vmatpush1.msra.mxu0 0.0
      %951 = vmatprep.subr.mxu0 0.0
      %952 = vmatpush1.msra.mxu0 0.0
      %953 = vmatprep.subr.mxu0 0.0
      %954 = vmatpush1.msra.mxu0 0.0
      %955 = vmatprep.subr.mxu0 0.0
      %956 = vmatpush1.msra.mxu0 0.0
      %957 = vmatprep.subr.mxu0 0.0
      %958 = vmatpush1.msra.mxu0 0.0
      %959 = vmatprep.subr.mxu0 0.0
      %960 = vmatpush1.msra.mxu0 0.0
      %961 = vmatprep.subr.mxu0 0.0
      %962 = vmatpush1.msra.mxu0 0.0
      %963 = vmatprep.subr.mxu0 0.0
      %964 = vmatpush1.msra.mxu0 0.0
      %965 = vmatprep.mubr.f32.mxu0 0.0
      %966 = vmatmul.mubr.f32.gmra.mrb[0].mxu0 %v899
      %v967 = vpop.f32.mrb[0].mxu0
      %v968 = vadd.f32 %v893, %v967
      %v969 = vpop.f32.mrb[0].mxu0
      %970 = vdwg.mxu0
      %v971 = vadd.f32 %v968, %v424
      %v972 = vxor.u32 %v971, 2147483648
      %v973 = vmul.f32 %v972, 1.442695
      %v974 = vpow.pop %v973
      %v975 = vadd.f32 %v974, 1.0
      %v976 = vrcp.pop %v975
      %v977 = vmul.f32 1.0, %v976
      %v978 = vtanh.pop %v971
      %v979 = vmul.f32 %v977, %v707
      %981 = vrot.lane.b32.xlu0 %v978, 116
      %v982 = vpop.permute.xlu0 %981
      %v984 = vmul.f32 %v977, %v982
      %986 = vrot.lane.b32.xlu0 %v984, 4
      %v987 = vpop.permute.xlu0 %986
      %v989 = vadd.f32 %v979, %v987
      %v990 = vtanh.pop %v989
      %992 = vrot.lane.b32.xlu0 %v990, 4
      %v993 = vpop.permute.xlu0 %992
      %v995 = vmul.f32 %v977, %v993
      %997 = vrot.lane.b32.xlu0 %v989, 124
      %v998 = vpop.permute.xlu0 %997
      %s1000 = scalar_lea.vmem [#allocation7], 8
      %1001 = vst.msk [vmem:[%s1000] sm:$0xff] %vm304, %v998
      %s1002 = scalar_lea.vmem [#allocation6], 16
      %v1003 = vld [vmem:[%s1002] sm:$0xff]
      %1005 = vrot.lane.b32.xlu0 %v820, 64
      %v1006 = vpop.permute.xlu0 %1005
      %v1007 = vsel %vm431, %v1006, 0
      %1009 = vmatprep.subr.mxu0 0.0
      %1010 = vmatpush1.msra.mxu0 %v410
      %1011 = vmatprep.subr.mxu0 0.0
      %1012 = vmatpush1.msra.mxu0 %v411
      %1013 = vmatprep.subr.mxu0 0.0
      %1014 = vmatpush1.msra.mxu0 %v412
      %1015 = vmatprep.subr.mxu0 0.0
      %1016 = vmatpush1.msra.mxu0 %v413
      %1017 = vmatprep.subr.mxu0 0.0
      %1018 = vmatpush1.msra.mxu0 0.0
      %1019 = vmatprep.subr.mxu0 0.0
      %1020 = vmatpush1.msra.mxu0 0.0
      %1021 = vmatprep.subr.mxu0 0.0
      %1022 = vmatpush1.msra.mxu0 0.0
      %1023 = vmatprep.subr.mxu0 0.0
      %1024 = vmatpush1.msra.mxu0 0.0
      %1025 = vmatprep.subr.mxu0 0.0
      %1026 = vmatpush1.msra.mxu0 0.0
      %1027 = vmatprep.subr.mxu0 0.0
      %1028 = vmatpush1.msra.mxu0 0.0
      %1029 = vmatprep.subr.mxu0 0.0
      %1030 = vmatpush1.msra.mxu0 0.0
      %1031 = vmatprep.subr.mxu0 0.0
      %1032 = vmatpush1.msra.mxu0 0.0
      %1033 = vmatprep.subr.mxu0 0.0
      %1034 = vmatpush1.msra.mxu0 0.0
      %1035 = vmatprep.subr.mxu0 0.0
      %1036 = vmatpush1.msra.mxu0 0.0
      %1037 = vmatprep.subr.mxu0 0.0
      %1038 = vmatpush1.msra.mxu0 0.0
      %1039 = vmatprep.subr.mxu0 0.0
      %1040 = vmatpush1.msra.mxu0 0.0
      %1041 = vmatprep.subr.mxu0 0.0
      %1042 = vmatpush1.msra.mxu0 0.0
      %1043 = vmatprep.subr.mxu0 0.0
      %1044 = vmatpush1.msra.mxu0 0.0
      %1045 = vmatprep.subr.mxu0 0.0
      %1046 = vmatpush1.msra.mxu0 0.0
      %1047 = vmatprep.subr.mxu0 0.0
      %1048 = vmatpush1.msra.mxu0 0.0
      %1049 = vmatprep.subr.mxu0 0.0
      %1050 = vmatpush1.msra.mxu0 0.0
      %1051 = vmatprep.subr.mxu0 0.0
      %1052 = vmatpush1.msra.mxu0 0.0
      %1053 = vmatprep.subr.mxu0 0.0
      %1054 = vmatpush1.msra.mxu0 0.0
      %1055 = vmatprep.subr.mxu0 0.0
      %1056 = vmatpush1.msra.mxu0 0.0
      %1057 = vmatprep.subr.mxu0 0.0
      %1058 = vmatpush1.msra.mxu0 0.0
      %1059 = vmatprep.subr.mxu0 0.0
      %1060 = vmatpush1.msra.mxu0 0.0
      %1061 = vmatprep.subr.mxu0 0.0
      %1062 = vmatpush1.msra.mxu0 0.0
      %1063 = vmatprep.subr.mxu0 0.0
      %1064 = vmatpush1.msra.mxu0 0.0
      %1065 = vmatprep.subr.mxu0 0.0
      %1066 = vmatpush1.msra.mxu0 0.0
      %1067 = vmatprep.subr.mxu0 0.0
      %1068 = vmatpush1.msra.mxu0 0.0
      %1069 = vmatprep.subr.mxu0 0.0
      %1070 = vmatpush1.msra.mxu0 0.0
      %1071 = vmatprep.subr.mxu0 0.0
      %1072 = vmatpush1.msra.mxu0 0.0
      %1073 = vmatprep.mubr.f32.mxu0 0.0
      %1074 = vmatmul.mubr.f32.gmra.mrb[0].mxu0 %v1007
      %v1075 = vpop.f32.mrb[0].mxu0
      %v1076 = vadd.f32 0.0, %v1075
      %v1077 = vpop.f32.mrb[0].mxu0
      %1078 = vdwg.mxu0
      %v1079 = vadd.f32 %v1003, %v1076
      %v1080 = vxor.u32 %v1079, 2147483648
      %v1081 = vmul.f32 %v1080, 1.442695
      %v1082 = vpow.pop %v1081
      %v1083 = vadd.f32 %v1082, 1.0
      %v1084 = vrcp.pop %v1083
      %v1085 = vmul.f32 1.0, %v1084
      %v1086 = vtanh.pop %v1079
      %v1087 = vmul.f32 %v1085, %v814
      %1089 = vrot.lane.b32.xlu0 %v1086, 32
      %v1090 = vpop.permute.xlu0 %1089
      %v1092 = vmul.f32 %v1085, %v1090
      %1094 = vrot.lane.b32.xlu0 %v1092, 32
      %v1095 = vpop.permute.xlu0 %1094
      %v1097 = vadd.f32 %v1087, %v1095
      %v1098 = vtanh.pop %v1097
      %1100 = vrot.lane.b32.xlu0 %v1098, 32
      %v1101 = vpop.permute.xlu0 %1100
      %v1103 = vmul.f32 %v1085, %v1101
      %1105 = vrot.lane.b32.xlu0 %v995, 120
      %v1106 = vpop.permute.xlu0 %1105
      %v1107 = vsel %vm304, %v1106, 0
      %1109 = vmatprep.subr.mxu0 0.0
      %1110 = vmatpush1.msra.mxu0 %v538
      %1111 = vmatprep.subr.mxu0 0.0
      %1112 = vmatpush1.msra.mxu0 0.0
      %1113 = vmatprep.subr.mxu0 0.0
      %1114 = vmatpush1.msra.mxu0 0.0
      %1115 = vmatprep.subr.mxu0 0.0
      %1116 = vmatpush1.msra.mxu0 0.0
      %1117 = vmatprep.subr.mxu0 0.0
      %1118 = vmatpush1.msra.mxu0 0.0
      %1119 = vmatprep.subr.mxu0 0.0
      %1120 = vmatpush1.msra.mxu0 0.0
      %1121 = vmatprep.subr.mxu0 0.0
      %1122 = vmatpush1.msra.mxu0 0.0
      %1123 = vmatprep.subr.mxu0 0.0
      %1124 = vmatpush1.msra.mxu0 0.0
      %1125 = vmatprep.subr.mxu0 0.0
      %1126 = vmatpush1.msra.mxu0 0.0
      %1127 = vmatprep.subr.mxu0 0.0
      %1128 = vmatpush1.msra.mxu0 0.0
      %1129 = vmatprep.subr.mxu0 0.0
      %1130 = vmatpush1.msra.mxu0 0.0
      %1131 = vmatprep.subr.mxu0 0.0
      %1132 = vmatpush1.msra.mxu0 0.0
      %1133 = vmatprep.subr.mxu0 0.0
      %1134 = vmatpush1.msra.mxu0 0.0
      %1135 = vmatprep.subr.mxu0 0.0
      %1136 = vmatpush1.msra.mxu0 0.0
      %1137 = vmatprep.subr.mxu0 0.0
      %1138 = vmatpush1.msra.mxu0 0.0
      %1139 = vmatprep.subr.mxu0 0.0
      %1140 = vmatpush1.msra.mxu0 0.0
      %1141 = vmatprep.subr.mxu0 0.0
      %1142 = vmatpush1.msra.mxu0 0.0
      %1143 = vmatprep.subr.mxu0 0.0
      %1144 = vmatpush1.msra.mxu0 0.0
      %1145 = vmatprep.subr.mxu0 0.0
      %1146 = vmatpush1.msra.mxu0 0.0
      %1147 = vmatprep.subr.mxu0 0.0
      %1148 = vmatpush1.msra.mxu0 0.0
      %1149 = vmatprep.subr.mxu0 0.0
      %1150 = vmatpush1.msra.mxu0 0.0
      %1151 = vmatprep.subr.mxu0 0.0
      %1152 = vmatpush1.msra.mxu0 0.0
      %1153 = vmatprep.subr.mxu0 0.0
      %1154 = vmatpush1.msra.mxu0 0.0
      %1155 = vmatprep.subr.mxu0 0.0
      %1156 = vmatpush1.msra.mxu0 0.0
      %1157 = vmatprep.subr.mxu0 0.0
      %1158 = vmatpush1.msra.mxu0 0.0
      %1159 = vmatprep.subr.mxu0 0.0
      %1160 = vmatpush1.msra.mxu0 0.0
      %1161 = vmatprep.subr.mxu0 0.0
      %1162 = vmatpush1.msra.mxu0 0.0
      %1163 = vmatprep.subr.mxu0 0.0
      %1164 = vmatpush1.msra.mxu0 0.0
      %1165 = vmatprep.subr.mxu0 0.0
      %1166 = vmatpush1.msra.mxu0 0.0
      %1167 = vmatprep.subr.mxu0 0.0
      %1168 = vmatpush1.msra.mxu0 0.0
      %1169 = vmatprep.subr.mxu0 0.0
      %1170 = vmatpush1.msra.mxu0 0.0
      %1171 = vmatprep.subr.mxu0 0.0
      %1172 = vmatpush1.msra.mxu0 0.0
      %1173 = vmatprep.mubr.f32.mxu0 0.0
      %1174 = vmatmul.mubr.f32.gmra.mrb[0].mxu0 %v1107
      %v1175 = vpop.f32.mrb[0].mxu0
      %v1176 = vadd.f32 0.0, %v1175
      %v1177 = vpop.f32.mrb[0].mxu0
      %1178 = vdwg.mxu0
      %1180 = vrot.lane.b32.xlu0 %v1097, 96
      %v1181 = vpop.permute.xlu0 %1180
      %v1182 = vsel %vm431, %v1181, 0
      %1184 = vmatprep.subr.mxu0 0.0
      %1185 = vmatpush1.msra.mxu0 %v414
      %1186 = vmatprep.subr.mxu0 0.0
      %1187 = vmatpush1.msra.mxu0 %v415
      %1188 = vmatprep.subr.mxu0 0.0
      %1189 = vmatpush1.msra.mxu0 %v416
      %1190 = vmatprep.subr.mxu0 0.0
      %1191 = vmatpush1.msra.mxu0 %v417
      %1192 = vmatprep.subr.mxu0 0.0
      %1193 = vmatpush1.msra.mxu0 0.0
      %1194 = vmatprep.subr.mxu0 0.0
      %1195 = vmatpush1.msra.mxu0 0.0
      %1196 = vmatprep.subr.mxu0 0.0
      %1197 = vmatpush1.msra.mxu0 0.0
      %1198 = vmatprep.subr.mxu0 0.0
      %1199 = vmatpush1.msra.mxu0 0.0
      %1200 = vmatprep.subr.mxu0 0.0
      %1201 = vmatpush1.msra.mxu0 0.0
      %1202 = vmatprep.subr.mxu0 0.0
      %1203 = vmatpush1.msra.mxu0 0.0
      %1204 = vmatprep.subr.mxu0 0.0
      %1205 = vmatpush1.msra.mxu0 0.0
      %1206 = vmatprep.subr.mxu0 0.0
      %1207 = vmatpush1.msra.mxu0 0.0
      %1208 = vmatprep.subr.mxu0 0.0
      %1209 = vmatpush1.msra.mxu0 0.0
      %1210 = vmatprep.subr.mxu0 0.0
      %1211 = vmatpush1.msra.mxu0 0.0
      %1212 = vmatprep.subr.mxu0 0.0
      %1213 = vmatpush1.msra.mxu0 0.0
      %1214 = vmatprep.subr.mxu0 0.0
      %1215 = vmatpush1.msra.mxu0 0.0
      %1216 = vmatprep.subr.mxu0 0.0
      %1217 = vmatpush1.msra.mxu0 0.0
      %1218 = vmatprep.subr.mxu0 0.0
      %1219 = vmatpush1.msra.mxu0 0.0
      %1220 = vmatprep.subr.mxu0 0.0
      %1221 = vmatpush1.msra.mxu0 0.0
      %1222 = vmatprep.subr.mxu0 0.0
      %1223 = vmatpush1.msra.mxu0 0.0
      %1224 = vmatprep.subr.mxu0 0.0
      %1225 = vmatpush1.msra.mxu0 0.0
      %1226 = vmatprep.subr.mxu0 0.0
      %1227 = vmatpush1.msra.mxu0 0.0
      %1228 = vmatprep.subr.mxu0 0.0
      %1229 = vmatpush1.msra.mxu0 0.0
      %1230 = vmatprep.subr.mxu0 0.0
      %1231 = vmatpush1.msra.mxu0 0.0
      %1232 = vmatprep.subr.mxu0 0.0
      %1233 = vmatpush1.msra.mxu0 0.0
      %1234 = vmatprep.subr.mxu0 0.0
      %1235 = vmatpush1.msra.mxu0 0.0
      %1236 = vmatprep.subr.mxu0 0.0
      %1237 = vmatpush1.msra.mxu0 0.0
      %1238 = vmatprep.subr.mxu0 0.0
      %1239 = vmatpush1.msra.mxu0 0.0
      %1240 = vmatprep.subr.mxu0 0.0
      %1241 = vmatpush1.msra.mxu0 0.0
      %1242 = vmatprep.subr.mxu0 0.0
      %1243 = vmatpush1.msra.mxu0 0.0
      %1244 = vmatprep.subr.mxu0 0.0
      %1245 = vmatpush1.msra.mxu0 0.0
      %1246 = vmatprep.subr.mxu0 0.0
      %1247 = vmatpush1.msra.mxu0 0.0
      %1248 = vmatprep.mubr.f32.mxu0 0.0
      %1249 = vmatmul.mubr.f32.gmra.mrb[0].mxu0 %v1182
      %v1250 = vpop.f32.mrb[0].mxu0
      %v1251 = vadd.f32 %v1176, %v1250
      %v1252 = vpop.f32.mrb[0].mxu0
      %1253 = vdwg.mxu0
      %v1254 = vadd.f32 %v1251, %v424
      %v1255 = vxor.u32 %v1254, 2147483648
      %v1256 = vmul.f32 %v1255, 1.442695
      %v1257 = vpow.pop %v1256
      %v1258 = vadd.f32 %v1257, 1.0
      %v1259 = vrcp.pop %v1258
      %v1260 = vmul.f32 1.0, %v1259
      %v1261 = vtanh.pop %v1254
      %v1262 = vmul.f32 %v1260, %v989
      %1264 = vrot.lane.b32.xlu0 %v1261, 116
      %v1265 = vpop.permute.xlu0 %1264
      %v1267 = vmul.f32 %v1260, %v1265
      %1269 = vrot.lane.b32.xlu0 %v1267, 4
      %v1270 = vpop.permute.xlu0 %1269
      %v1272 = vadd.f32 %v1262, %v1270
      %v1273 = vtanh.pop %v1272
      %1275 = vrot.lane.b32.xlu0 %v1273, 4
      %v1276 = vpop.permute.xlu0 %1275
      %v1278 = vmul.f32 %v1260, %v1276
      %1280 = vrot.lane.b32.xlu0 %v1272, 124
      %v1281 = vpop.permute.xlu0 %1280
      %s1283 = scalar_lea.vmem [#allocation7], 16
      %1284 = vst.msk [vmem:[%s1283] sm:$0xff] %vm304, %v1281
      %s1285 = scalar_lea.vmem [#allocation6], 24
      %v1286 = vld [vmem:[%s1285] sm:$0xff]
      %1288 = vrot.lane.b32.xlu0 %v1103, 64
      %v1289 = vpop.permute.xlu0 %1288
      %v1290 = vsel %vm431, %v1289, 0
      %1292 = vmatprep.subr.mxu0 0.0
      %1293 = vmatpush1.msra.mxu0 %v410
      %1294 = vmatprep.subr.mxu0 0.0
      %1295 = vmatpush1.msra.mxu0 %v411
      %1296 = vmatprep.subr.mxu0 0.0
      %1297 = vmatpush1.msra.mxu0 %v412
      %1298 = vmatprep.subr.mxu0 0.0
      %1299 = vmatpush1.msra.mxu0 %v413
      %1300 = vmatprep.subr.mxu0 0.0
      %1301 = vmatpush1.msra.mxu0 0.0
      %1302 = vmatprep.subr.mxu0 0.0
      %1303 = vmatpush1.msra.mxu0 0.0
      %1304 = vmatprep.subr.mxu0 0.0
      %1305 = vmatpush1.msra.mxu0 0.0
      %1306 = vmatprep.subr.mxu0 0.0
      %1307 = vmatpush1.msra.mxu0 0.0
      %1308 = vmatprep.subr.mxu0 0.0
      %1309 = vmatpush1.msra.mxu0 0.0
      %1310 = vmatprep.subr.mxu0 0.0
      %1311 = vmatpush1.msra.mxu0 0.0
      %1312 = vmatprep.subr.mxu0 0.0
      %1313 = vmatpush1.msra.mxu0 0.0
      %1314 = vmatprep.subr.mxu0 0.0
      %1315 = vmatpush1.msra.mxu0 0.0
      %1316 = vmatprep.subr.mxu0 0.0
      %1317 = vmatpush1.msra.mxu0 0.0
      %1318 = vmatprep.subr.mxu0 0.0
      %1319 = vmatpush1.msra.mxu0 0.0
      %1320 = vmatprep.subr.mxu0 0.0
      %1321 = vmatpush1.msra.mxu0 0.0
      %1322 = vmatprep.subr.mxu0 0.0
      %1323 = vmatpush1.msra.mxu0 0.0
      %1324 = vmatprep.subr.mxu0 0.0
      %1325 = vmatpush1.msra.mxu0 0.0
      %1326 = vmatprep.subr.mxu0 0.0
      %1327 = vmatpush1.msra.mxu0 0.0
      %1328 = vmatprep.subr.mxu0 0.0
      %1329 = vmatpush1.msra.mxu0 0.0
      %1330 = vmatprep.subr.mxu0 0.0
      %1331 = vmatpush1.msra.mxu0 0.0
      %1332 = vmatprep.subr.mxu0 0.0
      %1333 = vmatpush1.msra.mxu0 0.0
      %1334 = vmatprep.subr.mxu0 0.0
      %1335 = vmatpush1.msra.mxu0 0.0
      %1336 = vmatprep.subr.mxu0 0.0
      %1337 = vmatpush1.msra.mxu0 0.0
      %1338 = vmatprep.subr.mxu0 0.0
      %1339 = vmatpush1.msra.mxu0 0.0
      %1340 = vmatprep.subr.mxu0 0.0
      %1341 = vmatpush1.msra.mxu0 0.0
      %1342 = vmatprep.subr.mxu0 0.0
      %1343 = vmatpush1.msra.mxu0 0.0
      %1344 = vmatprep.subr.mxu0 0.0
      %1345 = vmatpush1.msra.mxu0 0.0
      %1346 = vmatprep.subr.mxu0 0.0
      %1347 = vmatpush1.msra.mxu0 0.0
      %1348 = vmatprep.subr.mxu0 0.0
      %1349 = vmatpush1.msra.mxu0 0.0
      %1350 = vmatprep.subr.mxu0 0.0
      %1351 = vmatpush1.msra.mxu0 0.0
      %1352 = vmatprep.subr.mxu0 0.0
      %1353 = vmatpush1.msra.mxu0 0.0
      %1354 = vmatprep.subr.mxu0 0.0
      %1355 = vmatpush1.msra.mxu0 0.0
      %1356 = vmatprep.mubr.f32.mxu0 0.0
      %1357 = vmatmul.mubr.f32.gmra.mrb[0].mxu0 %v1290
      %v1358 = vpop.f32.mrb[0].mxu0
      %v1359 = vadd.f32 0.0, %v1358
      %v1360 = vpop.f32.mrb[0].mxu0
      %1361 = vdwg.mxu0
      %v1362 = vadd.f32 %v1286, %v1359
      %v1363 = vxor.u32 %v1362, 2147483648
      %v1364 = vmul.f32 %v1363, 1.442695
      %v1365 = vpow.pop %v1364
      %v1366 = vadd.f32 %v1365, 1.0
      %v1367 = vrcp.pop %v1366
      %v1368 = vmul.f32 1.0, %v1367
      %v1369 = vtanh.pop %v1362
      %v1370 = vmul.f32 %v1368, %v1097
      %1372 = vrot.lane.b32.xlu0 %v1369, 32
      %v1373 = vpop.permute.xlu0 %1372
      %v1375 = vmul.f32 %v1368, %v1373
      %1377 = vrot.lane.b32.xlu0 %v1375, 32
      %v1378 = vpop.permute.xlu0 %1377
      %v1380 = vadd.f32 %v1370, %v1378
      %v1381 = vtanh.pop %v1380
      %1383 = vrot.lane.b32.xlu0 %v1381, 32
      %v1384 = vpop.permute.xlu0 %1383
      %v1386 = vmul.f32 %v1368, %v1384
      %1388 = vrot.lane.b32.xlu0 %v1278, 120
      %v1389 = vpop.permute.xlu0 %1388
      %v1390 = vsel %vm304, %v1389, 0
      %1392 = vmatprep.subr.mxu0 0.0
      %1393 = vmatpush1.msra.mxu0 %v538
      %1394 = vmatprep.subr.mxu0 0.0
      %1395 = vmatpush1.msra.mxu0 0.0
      %1396 = vmatprep.subr.mxu0 0.0
      %1397 = vmatpush1.msra.mxu0 0.0
      %1398 = vmatprep.subr.mxu0 0.0
      %1399 = vmatpush1.msra.mxu0 0.0
      %1400 = vmatprep.subr.mxu0 0.0
      %1401 = vmatpush1.msra.mxu0 0.0
      %1402 = vmatprep.subr.mxu0 0.0
      %1403 = vmatpush1.msra.mxu0 0.0
      %1404 = vmatprep.subr.mxu0 0.0
      %1405 = vmatpush1.msra.mxu0 0.0
      %1406 = vmatprep.subr.mxu0 0.0
      %1407 = vmatpush1.msra.mxu0 0.0
      %1408 = vmatprep.subr.mxu0 0.0
      %1409 = vmatpush1.msra.mxu0 0.0
      %1410 = vmatprep.subr.mxu0 0.0
      %1411 = vmatpush1.msra.mxu0 0.0
      %1412 = vmatprep.subr.mxu0 0.0
      %1413 = vmatpush1.msra.mxu0 0.0
      %1414 = vmatprep.subr.mxu0 0.0
      %1415 = vmatpush1.msra.mxu0 0.0
      %1416 = vmatprep.subr.mxu0 0.0
      %1417 = vmatpush1.msra.mxu0 0.0
      %1418 = vmatprep.subr.mxu0 0.0
      %1419 = vmatpush1.msra.mxu0 0.0
      %1420 = vmatprep.subr.mxu0 0.0
      %1421 = vmatpush1.msra.mxu0 0.0
      %1422 = vmatprep.subr.mxu0 0.0
      %1423 = vmatpush1.msra.mxu0 0.0
      %1424 = vmatprep.subr.mxu0 0.0
      %1425 = vmatpush1.msra.mxu0 0.0
      %1426 = vmatprep.subr.mxu0 0.0
      %1427 = vmatpush1.msra.mxu0 0.0
      %1428 = vmatprep.subr.mxu0 0.0
      %1429 = vmatpush1.msra.mxu0 0.0
      %1430 = vmatprep.subr.mxu0 0.0
      %1431 = vmatpush1.msra.mxu0 0.0
      %1432 = vmatprep.subr.mxu0 0.0
      %1433 = vmatpush1.msra.mxu0 0.0
      %1434 = vmatprep.subr.mxu0 0.0
      %1435 = vmatpush1.msra.mxu0 0.0
      %1436 = vmatprep.subr.mxu0 0.0
      %1437 = vmatpush1.msra.mxu0 0.0
      %1438 = vmatprep.subr.mxu0 0.0
      %1439 = vmatpush1.msra.mxu0 0.0
      %1440 = vmatprep.subr.mxu0 0.0
      %1441 = vmatpush1.msra.mxu0 0.0
      %1442 = vmatprep.subr.mxu0 0.0
      %1443 = vmatpush1.msra.mxu0 0.0
      %1444 = vmatprep.subr.mxu0 0.0
      %1445 = vmatpush1.msra.mxu0 0.0
      %1446 = vmatprep.subr.mxu0 0.0
      %1447 = vmatpush1.msra.mxu0 0.0
      %1448 = vmatprep.subr.mxu0 0.0
      %1449 = vmatpush1.msra.mxu0 0.0
      %1450 = vmatprep.subr.mxu0 0.0
      %1451 = vmatpush1.msra.mxu0 0.0
      %1452 = vmatprep.subr.mxu0 0.0
      %1453 = vmatpush1.msra.mxu0 0.0
      %1454 = vmatprep.subr.mxu0 0.0
      %1455 = vmatpush1.msra.mxu0 0.0
      %1456 = vmatprep.mubr.f32.mxu0 0.0
      %1457 = vmatmul.mubr.f32.gmra.mrb[0].mxu0 %v1390
      %v1458 = vpop.f32.mrb[0].mxu0
      %v1459 = vadd.f32 0.0, %v1458
      %v1460 = vpop.f32.mrb[0].mxu0
      %1461 = vdwg.mxu0
      %1463 = vrot.lane.b32.xlu0 %v1380, 96
      %v1464 = vpop.permute.xlu0 %1463
      %v1465 = vsel %vm431, %v1464, 0
      %1467 = vmatprep.subr.mxu0 0.0
      %1468 = vmatpush1.msra.mxu0 %v414
      %1469 = vmatprep.subr.mxu0 0.0
      %1470 = vmatpush1.msra.mxu0 %v415
      %1471 = vmatprep.subr.mxu0 0.0
      %1472 = vmatpush1.msra.mxu0 %v416
      %1473 = vmatprep.subr.mxu0 0.0
      %1474 = vmatpush1.msra.mxu0 %v417
      %1475 = vmatprep.subr.mxu0 0.0
      %1476 = vmatpush1.msra.mxu0 0.0
      %1477 = vmatprep.subr.mxu0 0.0
      %1478 = vmatpush1.msra.mxu0 0.0
      %1479 = vmatprep.subr.mxu0 0.0
      %1480 = vmatpush1.msra.mxu0 0.0
      %1481 = vmatprep.subr.mxu0 0.0
      %1482 = vmatpush1.msra.mxu0 0.0
      %1483 = vmatprep.subr.mxu0 0.0
      %1484 = vmatpush1.msra.mxu0 0.0
      %1485 = vmatprep.subr.mxu0 0.0
      %1486 = vmatpush1.msra.mxu0 0.0
      %1487 = vmatprep.subr.mxu0 0.0
      %1488 = vmatpush1.msra.mxu0 0.0
      %1489 = vmatprep.subr.mxu0 0.0
      %1490 = vmatpush1.msra.mxu0 0.0
      %1491 = vmatprep.subr.mxu0 0.0
      %1492 = vmatpush1.msra.mxu0 0.0
      %1493 = vmatprep.subr.mxu0 0.0
      %1494 = vmatpush1.msra.mxu0 0.0
      %1495 = vmatprep.subr.mxu0 0.0
      %1496 = vmatpush1.msra.mxu0 0.0
      %1497 = vmatprep.subr.mxu0 0.0
      %1498 = vmatpush1.msra.mxu0 0.0
      %1499 = vmatprep.subr.mxu0 0.0
      %1500 = vmatpush1.msra.mxu0 0.0
      %1501 = vmatprep.subr.mxu0 0.0
      %1502 = vmatpush1.msra.mxu0 0.0
      %1503 = vmatprep.subr.mxu0 0.0
      %1504 = vmatpush1.msra.mxu0 0.0
      %1505 = vmatprep.subr.mxu0 0.0
      %1506 = vmatpush1.msra.mxu0 0.0
      %1507 = vmatprep.subr.mxu0 0.0
      %1508 = vmatpush1.msra.mxu0 0.0
      %1509 = vmatprep.subr.mxu0 0.0
      %1510 = vmatpush1.msra.mxu0 0.0
      %1511 = vmatprep.subr.mxu0 0.0
      %1512 = vmatpush1.msra.mxu0 0.0
      %1513 = vmatprep.subr.mxu0 0.0
      %1514 = vmatpush1.msra.mxu0 0.0
      %1515 = vmatprep.subr.mxu0 0.0
      %1516 = vmatpush1.msra.mxu0 0.0
      %1517 = vmatprep.subr.mxu0 0.0
      %1518 = vmatpush1.msra.mxu0 0.0
      %1519 = vmatprep.subr.mxu0 0.0
      %1520 = vmatpush1.msra.mxu0 0.0
      %1521 = vmatprep.subr.mxu0 0.0
      %1522 = vmatpush1.msra.mxu0 0.0
      %1523 = vmatprep.subr.mxu0 0.0
      %1524 = vmatpush1.msra.mxu0 0.0
      %1525 = vmatprep.subr.mxu0 0.0
      %1526 = vmatpush1.msra.mxu0 0.0
      %1527 = vmatprep.subr.mxu0 0.0
      %1528 = vmatpush1.msra.mxu0 0.0
      %1529 = vmatprep.subr.mxu0 0.0
      %1530 = vmatpush1.msra.mxu0 0.0
      %1531 = vmatprep.mubr.f32.mxu0 0.0
      %1532 = vmatmul.mubr.f32.gmra.mrb[0].mxu0 %v1465
      %v1533 = vpop.f32.mrb[0].mxu0
      %v1534 = vadd.f32 %v1459, %v1533
      %v1535 = vpop.f32.mrb[0].mxu0
      %1536 = vdwg.mxu0
      %v1537 = vadd.f32 %v1534, %v424
      %v1538 = vxor.u32 %v1537, 2147483648
      %v1539 = vmul.f32 %v1538, 1.442695
      %v1540 = vpow.pop %v1539
      %v1541 = vadd.f32 %v1540, 1.0
      %v1542 = vrcp.pop %v1541
      %v1543 = vmul.f32 1.0, %v1542
      %v1544 = vtanh.pop %v1537
      %v1545 = vmul.f32 %v1543, %v1272
      %1547 = vrot.lane.b32.xlu0 %v1544, 116
      %v1548 = vpop.permute.xlu0 %1547
      %v1550 = vmul.f32 %v1543, %v1548
      %1552 = vrot.lane.b32.xlu0 %v1550, 4
      %v1553 = vpop.permute.xlu0 %1552
      %v1555 = vadd.f32 %v1545, %v1553
      %v1556 = vtanh.pop %v1555
      %1558 = vrot.lane.b32.xlu0 %v1556, 4
      %v1559 = vpop.permute.xlu0 %1558
      %v1561 = vmul.f32 %v1543, %v1559
      %1563 = vrot.lane.b32.xlu0 %v1555, 124
      %v1564 = vpop.permute.xlu0 %1563
      %s1566 = scalar_lea.vmem [#allocation7], 24
      %1567 = vst.msk [vmem:[%s1566] sm:$0xff] %vm304, %v1564
      %1569 = vrot.lane.b32.xlu0 %v1386, 64
      %v1570 = vpop.permute.xlu0 %1569
      %1572 = vst.msk [vmem:[#allocation2] sm:$0xff] %vm431, %v1570
      %1574 = vst.msk [vmem:[#allocation3] sm:$0xff] %vm431, %v1464
      %1576 = vrot.lane.b32.xlu0 %v1561, 120
      %v1577 = vpop.permute.xlu0 %1576
      %1579 = vst.msk [vmem:[#allocation4] sm:$0xff] %vm304, %v1577
      %1580 = vst.msk [vmem:[#allocation5] sm:$0xff] %vm304, %v1564
      %v1581 = vld [vmem:[#allocation7] sm:$0xff]
      %v1582 = vld [vmem:[#allocation7 + $0x8] sm:$0xff]
      %v1583 = vld [vmem:[#allocation7 + $0x10] sm:$0xff]
      %v1584 = vld [vmem:[#allocation7 + $0x18] sm:$0xff]
      %v1585 = vld [vmem:[%s274] sm:$0xff]
      %v1586 = vld [vmem:[%s274 + $0x8] sm:$0xff]
      %v1587 = vld [vmem:[%s274 + $0x10] sm:$0xff]
      %v1588 = vld [vmem:[%s274 + $0x18] sm:$0xff]
      %v1589 = vadd.f32 %v1581, %v1585
      %v1590 = vadd.f32 %v1582, %v1586
      %v1591 = vadd.f32 %v1583, %v1587
      %v1592 = vadd.f32 %v1584, %v1588
      %1593 = vst.msk [vmem:[%s280] sm:$0xff] %vm304, %v1589
      %1594 = vst.msk [vmem:[%s280 + $0x8] sm:$0xff] %vm304, %v1590
      %1595 = vst.msk [vmem:[%s280 + $0x10] sm:$0xff] %vm304, %v1591
      %1596 = vst.msk [vmem:[%s280 + $0x18] sm:$0xff] %vm304, %v1592
      %s1597 = smul.u32 4, %s18
      %p1598 = scmp.lt.s32.totalorder %s1597, 7
      %s1599 = scalar_select %p1598, %s1597, 7
      %s1600 = smul.addr %s1599, 8
      %s1601 = scalar_lea.vmem %s7, %s1600
      // Predicated region
      $region53: #{tpu_custom_call.1} parent=47 // pred_check
        %p1602 = pneg %p188
      $region54: #{tpu_custom_call.1} parent=47 // pred_check_branch
        %1604 = sbr.rel (%p1602) target = $region56
      $region55: #{tpu_custom_call.1} parent=47 // pred_region
        %s1605 = smul.u32 4, %s18
      $region56: #{tpu_custom_call.1} parent=47 // pred_fallthru
        _
    $region48: #{tpu_custom_call.1} parent=5 // pred_fallthru
      _
    %p1606 = scmp.le.s32.totalorder 2, %s13
    // Predicated region
    $region57: #{tpu_custom_call.1} parent=5 // pred_check
      %p1607 = pneg %p1606
    $region58: #{tpu_custom_call.1} parent=5 // pred_check_branch
      %1609 = sbr.rel (%p1607) target = $region60
    $region59: #{tpu_custom_call.1} parent=5 // pred_region
      %s1610 = ssub.s32 %s13, 2
      // Predicated region
      $region61: #{tpu_custom_call.1} parent=59 // pred_check
        %p1611 = pneg %p194
      $region62: #{tpu_custom_call.1} parent=59 // pred_check_branch
        %1613 = sbr.rel (%p1611) target = $region64
      $region63: #{tpu_custom_call.1} parent=59 // pred_region
        %s1614 = smul.u32 4, %s19
        %p1615 = scmp.lt.s32.totalorder %s1614, 7
        %s1616 = scalar_select %p1615, %s1614, 7
        %s1617 = smul.addr %s1616, 8
        %s1618 = scalar_lea.vmem %s7, %s1617
      $region64: #{tpu_custom_call.1} parent=59 // pred_fallthru
        _
    $region60: #{tpu_custom_call.1} parent=5 // pred_fallthru
      _
  $region6: #{tpu_custom_call.1} parent=0 // loop_footer
    %s17 = sadd.s32 1, %s13
  $region7: #{tpu_custom_call.1} parent=0 // loop_footer_branch
    %12 = sbr.rel target = $region3
  $region8: #{tpu_custom_call.1} parent=0 // loop_exit
    _

</llo_original>
